<compile_context>
chip_gen: v6e
topology: v6e:2x2x1
jax: 0.10.0
libtpu: 0.0.40
codegen_flags: <defaults>
</compile_context>

<pallas_src>
import jax
import jax.numpy as jnp
from jax import lax
from jax.experimental import pallas as pl
from jax.experimental.pallas import tpu as pltpu

B = 2            # batch
U = 2            # reaction tokens per sample (fixed by the 'reaction' layout)
D = 512          # feature dim
E = 1            # num_experts (PLE_Reaction default)
GATE_REAL = 2 * E        # real gate outputs (share-expert weight, task-expert weight)
GATE_PAD = 128           # lane-padded gate block width
D_ALL = 2 * D + GATE_PAD  # fused matmul output width: [e_share | e_task | gate(pad)]


def _round_up(x, m):
    return (x + m - 1) // m * m


def ple_reaction_fused_kernel(x_ref, w_ref, b_ref, o_ref):
    # x_ref: (TM, D)      bf16 rows, row = U*sample + token (TM even, samples never split)
    # w_ref: (D, D_ALL)   bf16 fused weight  [Ws | Wt | Wg zero-padded to 128 lanes]
    # b_ref: (1, D_ALL)   f32 fused bias
    # o_ref: (TM, D)      f32 task output rows
    y = jnp.dot(x_ref[...], w_ref[...], preferred_element_type=jnp.float32)
    y = y + b_ref[...]                          # f32 bias add (VPU)

    e_s = jnp.maximum(y[:, :D], 0.0)            # share expert (Linear+ReLU)
    e_t = jnp.maximum(y[:, D:2 * D], 0.0)       # task expert  (Linear+ReLU)

    # Per-row gate logits live in lanes [0, GATE_REAL) of the last 128-lane block.
    # Reference gate = Linear(mean over the U=2 token rows); by linearity this equals
    # the mean of the per-row gate logits of the two rows of each sample.
    g_rows = y[:, 2 * D:]                       # (TM, 128), real values in cols 0..1
    tm = g_rows.shape[0]
    g_up = pltpu.roll(g_rows, shift=tm - 1, axis=0)   # g_up[r]  = g_rows[(r+1) % tm]
    g_dn = pltpu.roll(g_rows, shift=1, axis=0)        # g_dn[r]  = g_rows[(r-1) % tm]
    row = lax.broadcasted_iota(jnp.int32, g_rows.shape, 0)
    partner = jnp.where((row & 1) == 0, g_up, g_dn)   # the other token of this sample
    g = 0.5 * (g_rows + partner)                # per-row copy of the per-sample gate

    # out = g0 * e_share + g1 * e_task   (no softmax on task gates, per reference)
    o_ref[...] = g[:, 0:1] * e_s + g[:, 1:2] * e_t


def _fuse_params(share_expert, task_expert, task_gate):
    ws, bs = share_expert
    wt, bt = task_expert
    wg, bg = task_gate
    wg_pad = jnp.zeros((D, GATE_PAD), jnp.float32).at[:, :GATE_REAL].set(wg)
    bg_pad = jnp.zeros((1, GATE_PAD), jnp.float32).at[:, :GATE_REAL].set(bg)
    w_all = jnp.concatenate([ws, wt, wg_pad], axis=1).astype(jnp.bfloat16)  # (D, D_ALL)
    b_all = jnp.concatenate([bs, bt, bg_pad], axis=1).astype(jnp.float32)   # (1, D_ALL)
    return w_all, b_all


def run_ple_task_kernel(x, share_expert, task_expert, task_gate):
    b, u, d = x.shape
    assert u == U and d == D
    w_all, b_all = _fuse_params(share_expert, task_expert, task_gate)

    rows = b * u
    tm = min(256, _round_up(rows, 8))           # row tile: multiple of 8 (and of U=2)
    rows_pad = _round_up(rows, tm)
    x2 = x.reshape(rows, d).astype(jnp.bfloat16)
    if rows_pad != rows:
        x2 = jnp.pad(x2, ((0, rows_pad - rows), (0, 0)))

    flops = 2 * rows_pad * D * D_ALL
    bytes_accessed = int(w_all.size) * 2 + int(b_all.size) * 4 \
        + int(x2.size) * 2 + rows_pad * D * 4

    out2 = pl.pallas_call(
        ple_reaction_fused_kernel,
        out_shape=jax.ShapeDtypeStruct((rows_pad, D), jnp.float32),
        grid=(rows_pad // tm,),
        in_specs=[
            pl.BlockSpec((tm, D), lambda i: (i, 0)),        # activation rows (tiled)
            pl.BlockSpec((D, D_ALL), lambda i: (0, 0)),     # fused weight, VMEM-resident
            pl.BlockSpec((1, D_ALL), lambda i: (0, 0)),     # fused bias, VMEM-resident
        ],
        out_specs=pl.BlockSpec((tm, D), lambda i: (i, 0)),
        compiler_params=pltpu.CompilerParams(
            dimension_semantics=("parallel",)),
        cost_estimate=pl.CostEstimate(
            flops=flops, transcendentals=0, bytes_accessed=bytes_accessed),
    )(x2, w_all, b_all)

    return out2[:rows].reshape(b, u, D)


def _linear_params(key, in_dim, out_dim):
    kw, kb = jax.random.split(key)
    bound = 1.0 / (in_dim ** 0.5)
    w = jax.random.uniform(kw, (in_dim, out_dim), jnp.float32, -bound, bound)
    b = jax.random.uniform(kb, (1, out_dim), jnp.float32, -bound, bound)
    return w, b


def init_params(key):
    keys = jax.random.split(key, 5)
    return {
        "share_expert": _linear_params(keys[0], D, D),
        "task_experts": [_linear_params(keys[1], D, D), _linear_params(keys[2], D, D)],
        "task_gates": [_linear_params(keys[3], D, GATE_REAL),
                       _linear_params(keys[4], D, GATE_REAL)],
    }


def ple_reaction_forward(cls_x=None, rpre_x=None, params=None):
    """Mirrors PLE_Reaction.forward: returns [task0_out_or_None, task1_out_or_None].

    The original module only runs without error when exactly one of cls_x / rpre_x is
    given (otherwise its share-gate einsum shape-mismatches), so share_x == task input.
    If both tasks were ever valid, a single pallas_call sharing the e_share matmul and
    the x DMA (weights stacked along the fused output dim) would halve launch overhead.
    """
    if cls_x is None and rpre_x is None:
        raise ValueError("one of cls_x / rpre_x must be provided")
    task_x = [cls_x, rpre_x]
    task_out_list = []
    for i, tx in enumerate(task_x):
        if tx is None:
            task_out_list.append(None)
        else:
            task_out_list.append(
                run_ple_task_kernel(tx, params["share_expert"],
                                    params["task_experts"][i],
                                    params["task_gates"][i]))
    return task_out_list


def reference_task_out(x, params, task_idx):
    """Pure-JAX f32 reference mirroring the PyTorch math."""
    ws, bs = params["share_expert"]
    wt, bt = params["task_experts"][task_idx]
    wg, bg = params["task_gates"][task_idx]
    e_s = jnp.maximum(x @ ws + bs, 0.0)
    e_t = jnp.maximum(x @ wt + bt, 0.0)
    g = jnp.mean(x, axis=1) @ wg + bg            # (B, 2), no softmax for task gates
    return g[:, 0:1, None] * e_s + g[:, 1:2, None] * e_t


if __name__ == "__main__":
    key = jax.random.PRNGKey(0)
    kx, kp = jax.random.split(key)
    cls_x = jax.random.normal(kx, (B, U, D), dtype=jnp.float32)
    params = init_params(kp)

    task_out = ple_reaction_forward(cls_x=cls_x, rpre_x=None, params=params)
    out0 = jax.block_until_ready(task_out[0])
    assert task_out[1] is None
    assert out0.shape == (B, U, D) and out0.dtype == jnp.float32

    # bf16 weight/activation storage (f32 MXU accumulation) -> compare against the
    # f32 reference with a correspondingly loosened tolerance.
    ref0 = reference_task_out(cls_x, params, 0)
    assert jnp.allclose(out0, ref0, atol=2e-2, rtol=2e-2), \
        float(jnp.max(jnp.abs(out0 - ref0)))

    print("KERNEL_OK")
</pallas_src>

<mosaic_0001>
module attributes {stable_mosaic.version = 11 : i64} {
  func.func @ple_reaction_fused_kernel(%arg0: i32, %arg1: memref<8x512xbf16, #tpu.memory_space<vmem>>, %arg2: memref<512x1152xbf16, #tpu.memory_space<vmem>>, %arg3: memref<1x1152xf32, #tpu.memory_space<vmem>>, %arg4: memref<8x512xf32, #tpu.memory_space<vmem>>) attributes {dimension_semantics = [#tpu.dimension_semantics<parallel>], iteration_bounds = array<i64: 1>, scalar_prefetch = 0 : i64, scratch_operands = 0 : i64, tpu.core_type = #tpu.core_type<tc>, window_params = [{transform_indices = @transform_0, window_bounds = array<i64: 8, 512>}, {pipeline_mode = #tpu.pipeline_mode<synchronous>, transform_indices = @transform_1, window_bounds = array<i64: 512, 1152>}, {pipeline_mode = #tpu.pipeline_mode<synchronous>, transform_indices = @transform_2, window_bounds = array<i64: 1, 1152>}, {transform_indices = @transform_3, window_bounds = array<i64: 8, 512>}]} {
    %c0 = arith.constant 0 : index
    %c0_0 = arith.constant 0 : index
    %0 = vector.load %arg1[%c0, %c0_0] : memref<8x512xbf16, #tpu.memory_space<vmem>>, vector<8x512xbf16>
    %c0_1 = arith.constant 0 : index
    %c0_2 = arith.constant 0 : index
    %1 = vector.load %arg2[%c0_1, %c0_2] : memref<512x1152xbf16, #tpu.memory_space<vmem>>, vector<512x1152xbf16>
    %cst = arith.constant dense<0.000000e+00> : vector<8x1152xf32>
    %2 = tpu.matmul %0, %1, %cst {dimension_numbers = #tpu.dot_dimension_numbers<[1], [0], [0], [1], [0, 0, 1, 1], [], []>} : vector<8x512xbf16>, vector<512x1152xbf16>, vector<8x1152xf32> -> vector<8x1152xf32>
    %c0_3 = arith.constant 0 : index
    %c0_4 = arith.constant 0 : index
    %3 = vector.load %arg3[%c0_3, %c0_4] : memref<1x1152xf32, #tpu.memory_space<vmem>>, vector<1x1152xf32>
    %4 = vector.broadcast %3 : vector<1x1152xf32> to vector<8x1152xf32>
    %5 = arith.addf %2, %4 : vector<8x1152xf32>
    %6 = vector.extract_strided_slice %5 {offsets = [0, 0], sizes = [8, 512], strides = [1, 1]} : vector<8x1152xf32> to vector<8x512xf32>
    %cst_5 = arith.constant 0.000000e+00 : f32
    %7 = vector.broadcast %cst_5 : f32 to vector<8x512xf32>
    %8 = arith.maximumf %6, %7 : vector<8x512xf32>
    %9 = vector.extract_strided_slice %5 {offsets = [0, 512], sizes = [8, 512], strides = [1, 1]} : vector<8x1152xf32> to vector<8x512xf32>
    %cst_6 = arith.constant 0.000000e+00 : f32
    %10 = vector.broadcast %cst_6 : f32 to vector<8x512xf32>
    %11 = arith.maximumf %9, %10 : vector<8x512xf32>
    %12 = vector.extract_strided_slice %5 {offsets = [0, 1024], sizes = [8, 128], strides = [1, 1]} : vector<8x1152xf32> to vector<8x128xf32>
    %c7_i32 = arith.constant 7 : i32
    %13 = tpu.dynamic_rotate %12 by %c7_i32 dim 0 : vector<8x128xf32>, i32 -> vector<8x128xf32>
    %c1_i32 = arith.constant 1 : i32
    %14 = tpu.dynamic_rotate %12 by %c1_i32 dim 0 : vector<8x128xf32>, i32 -> vector<8x128xf32>
    %15 = tpu.iota {dimensions = array<i32: 0>} : vector<8x128xi32>
    %c1_i32_7 = arith.constant 1 : i32
    %16 = vector.broadcast %c1_i32_7 : i32 to vector<8x128xi32>
    %17 = arith.andi %15, %16 : vector<8x128xi32>
    %c0_i32 = arith.constant 0 : i32
    %18 = vector.broadcast %c0_i32 : i32 to vector<8x128xi32>
    %19 = arith.cmpi eq, %17, %18 : vector<8x128xi32>
    %20 = arith.select %19, %13, %14 : vector<8x128xi1>, vector<8x128xf32>
    %21 = arith.addf %12, %20 : vector<8x128xf32>
    %cst_8 = arith.constant 5.000000e-01 : f32
    %22 = vector.broadcast %cst_8 : f32 to vector<8x128xf32>
    %23 = arith.mulf %22, %21 : vector<8x128xf32>
    %24 = vector.extract_strided_slice %23 {offsets = [0, 0], sizes = [8, 1], strides = [1, 1]} : vector<8x128xf32> to vector<8x1xf32>
    %25 = vector.broadcast %24 : vector<8x1xf32> to vector<8x512xf32>
    %26 = arith.mulf %25, %8 : vector<8x512xf32>
    %27 = vector.extract_strided_slice %23 {offsets = [0, 1], sizes = [8, 1], strides = [1, 1]} : vector<8x128xf32> to vector<8x1xf32>
    %28 = vector.broadcast %27 : vector<8x1xf32> to vector<8x512xf32>
    %29 = arith.mulf %28, %11 : vector<8x512xf32>
    %30 = arith.addf %26, %29 : vector<8x512xf32>
    %c0_9 = arith.constant 0 : index
    %c0_10 = arith.constant 0 : index
    %31 = vector.load %arg4[%c0_9, %c0_10] : memref<8x512xf32, #tpu.memory_space<vmem>>, vector<8x512xf32>
    tpu.vector_store %arg4[%c0_9, %c0_10], %30 {strides = array<i32>} : memref<8x512xf32, #tpu.memory_space<vmem>>, vector<8x512xf32>,
    return
  }
  func.func @transform_0(%arg0: i32) -> (i32, i32) {
    %c0_i32 = arith.constant 0 : i32
    %c0_i32_0 = arith.constant 0 : i32
    return %arg0, %c0_i32 : i32, i32
  }
  func.func @transform_1(%arg0: i32) -> (i32, i32) {
    %c0_i32 = arith.constant 0 : i32
    %c0_i32_0 = arith.constant 0 : i32
    %c0_i32_1 = arith.constant 0 : i32
    return %c0_i32, %c0_i32_0 : i32, i32
  }
  func.func @transform_2(%arg0: i32) -> (i32, i32) {
    %c0_i32 = arith.constant 0 : i32
    %c0_i32_0 = arith.constant 0 : i32
    %c0_i32_1 = arith.constant 0 : i32
    return %c0_i32, %c0_i32_0 : i32, i32
  }
  func.func @transform_3(%arg0: i32) -> (i32, i32) {
    %c0_i32 = arith.constant 0 : i32
    %c0_i32_0 = arith.constant 0 : i32
    return %arg0, %c0_i32 : i32, i32
  }
}

</mosaic_0001>

<llo_original>
// kernel: tpu_custom_call.1
$region0: #{tpu_custom_call.1}
  #allocation0 [shape = 'u32[]', space=smem, size = 0x4, offset = 0x4, fixed_abs, tag = 'smem constant byte address 0x4 - core index']
  #allocation1 [shape = 'u32[144,128]{1,0:T(1,128)}', space=vmem, size = 0x12000, scoped, tag = 'internal scratch']
  %s0 = inlined_call_operand.hbm [shape: bf16[8,512], index: 0, kind: input, shape index: {}]
  %s1 = inlined_call_operand.hbm [shape: bf16[512,1152], index: 1, kind: input, shape index: {}]
  %s2 = inlined_call_operand.hbm [shape: f32[1,1152], index: 2, kind: input, shape index: {}]
  %s3 = inlined_call_operand.hbm [shape: f32[8,512], index: 3, kind: output, shape index: {}]
  %s4 = sld [smem:[#allocation0]]
  $region34: #{tpu_custom_call.1} parent=0
    _
  %s6 = ssub.s32 1, %s4
  %s7 = scalar_select 0, %s6, %s4
  $region1: #{tpu_custom_call.1} parent=0
    #allocation2 [shape = 'u8[8192]{0}', space=vmem, size = 0x2000, scoped, tag = 'input window, operand 0, single buffered']
    #allocation3 [shape = 's32[1]{0}', space=sflag, size = 0x4, scoped, tag = 'scoped memory for tpu_custom_call.1']
    #allocation4 [shape = 's32[1]{0}', space=sflag, size = 0x4, scoped, tag = 'scoped memory for tpu_custom_call.1']
    #allocation5 [shape = 'u8[1179648]{0}', space=vmem, size = 0x120000, scoped, tag = 'input window, operand 1, single buffered']
    #allocation6 [shape = 's32[1]{0}', space=sflag, size = 0x4, scoped, tag = 'scoped memory for tpu_custom_call.1']
    #allocation7 [shape = 'u8[4608]{0}', space=vmem, size = 0x1400, scoped, tag = 'input window, operand 2, single buffered']
    #allocation8 [shape = 'u8[16384]{0}', space=vmem, size = 0x4000, scoped, tag = 'output window, operand 0, single buffered']
    %8 = vsyncpa [#allocation3], 0
    %9 = vsyncpa [#allocation6], 0
    %10 = vsyncpa [#allocation4], 0
    // Predicated region
    $region2: #{tpu_custom_call.1} parent=1 // pred_check
      _
    $region3: #{tpu_custom_call.1} parent=1 // pred_check_branch
      %12 = sbr.rel (0) target = $region5
    $region4: #{tpu_custom_call.1} parent=1 // pred_region
      %s14 = ssub.s32 256, 256
      %15 = vsyncadd [#allocation3], %s14
      %s17 = sshll.u32 [#allocation2], 4
      %s18 = int_to_ptr.vmem [resolvable:$true] %s17
      %20 = dma.hbm_to_vmem [thread:$0]  %s0, 256, %s18, [#allocation3]
    $region5: #{tpu_custom_call.1} parent=1 // pred_fallthru
      _
    // Predicated region
    $region6: #{tpu_custom_call.1} parent=1 // pred_check
      _
    $region7: #{tpu_custom_call.1} parent=1 // pred_check_branch
      %22 = sbr.rel (0) target = $region9
    $region8: #{tpu_custom_call.1} parent=1 // pred_region
      %s24 = ssub.s32 36864, 36864
      %25 = vsyncadd [#allocation6], %s24
      %s26 = sshll.u32 [#allocation5], 4
      %s27 = int_to_ptr.vmem [resolvable:$true] %s26
      %32 = dma.hbm_to_vmem [thread:$0]  %s1, 36864, %s27, [#allocation6], 576, 576, 36
    $region9: #{tpu_custom_call.1} parent=1 // pred_fallthru
      _
    // Predicated region
    $region10: #{tpu_custom_call.1} parent=1 // pred_check
      _
    $region11: #{tpu_custom_call.1} parent=1 // pred_check_branch
      %34 = sbr.rel (0) target = $region13
    $region12: #{tpu_custom_call.1} parent=1 // pred_region
      %s36 = ssub.s32 144, 144
      %37 = vsyncadd [#allocation6], %s36
      %s39 = sshll.u32 [#allocation7], 4
      %s40 = int_to_ptr.vmem [resolvable:$true] %s39
      %42 = dma.hbm_to_vmem [thread:$0]  %s2, 144, %s40, [#allocation6]
    $region13: #{tpu_custom_call.1} parent=1 // pred_fallthru
      _
    // Predicated region
    $region14: #{tpu_custom_call.1} parent=1 // pred_check
      _
    $region15: #{tpu_custom_call.1} parent=1 // pred_check_branch
      %44 = sbr.rel (0) target = $region17
    $region16: #{tpu_custom_call.1} parent=1 // pred_region
      %45 = dma.done [#allocation3], 256
    $region17: #{tpu_custom_call.1} parent=1 // pred_fallthru
      _
    // Predicated region
    $region18: #{tpu_custom_call.1} parent=1 // pred_check
      _
    $region19: #{tpu_custom_call.1} parent=1 // pred_check_branch
      %47 = sbr.rel (0) target = $region21
    $region20: #{tpu_custom_call.1} parent=1 // pred_region
      %48 = dma.done [#allocation6], 36864
    $region21: #{tpu_custom_call.1} parent=1 // pred_fallthru
      _
    // Predicated region
    $region22: #{tpu_custom_call.1} parent=1 // pred_check
      _
    $region23: #{tpu_custom_call.1} parent=1 // pred_check_branch
      %50 = sbr.rel (0) target = $region25
    $region24: #{tpu_custom_call.1} parent=1 // pred_region
      %51 = dma.done [#allocation6], 144
    $region25: #{tpu_custom_call.1} parent=1 // pred_fallthru
      _
    %v53 = vld [vmem:[#allocation2] sm:$0xff]
    %v54 = vld [vmem:[#allocation2 + $0x8] sm:$0xff]
    %v55 = vld [vmem:[#allocation5] sm:$0xff]
    %v56 = vld [vmem:[#allocation5 + $0x8] sm:$0xff]
    %v57 = vld [vmem:[#allocation5 + $0x10] sm:$0xff]
    %v58 = vld [vmem:[#allocation5 + $0x18] sm:$0xff]
    %v59 = vld [vmem:[#allocation5 + $0x20] sm:$0xf]
    %v60 = vld [vmem:[#allocation5 + $0x24] sm:$0xff]
    %v61 = vld [vmem:[#allocation5 + $0x2c] sm:$0xff]
    %v62 = vld [vmem:[#allocation5 + $0x34] sm:$0xff]
    %v63 = vld [vmem:[#allocation5 + $0x3c] sm:$0xff]
    %v64 = vld [vmem:[#allocation5 + $0x44] sm:$0xf]
    %v65 = vld [vmem:[#allocation5 + $0x48] sm:$0xff]
    %v66 = vld [vmem:[#allocation5 + $0x50] sm:$0xff]
    %v67 = vld [vmem:[#allocation5 + $0x58] sm:$0xff]
    %v68 = vld [vmem:[#allocation5 + $0x60] sm:$0xff]
    %v69 = vld [vmem:[#allocation5 + $0x68] sm:$0xf]
    %v70 = vld [vmem:[#allocation5 + $0x6c] sm:$0xff]
    %v71 = vld [vmem:[#allocation5 + $0x74] sm:$0xff]
    %v72 = vld [vmem:[#allocation5 + $0x7c] sm:$0xff]
    %v73 = vld [vmem:[#allocation5 + $0x84] sm:$0xff]
    %v74 = vld [vmem:[#allocation5 + $0x8c] sm:$0xf]
    %v75 = vld [vmem:[#allocation5 + $0x90] sm:$0xff]
    %v76 = vld [vmem:[#allocation5 + $0x98] sm:$0xff]
    %v77 = vld [vmem:[#allocation5 + $0xa0] sm:$0xff]
    %v78 = vld [vmem:[#allocation5 + $0xa8] sm:$0xff]
    %v79 = vld [vmem:[#allocation5 + $0xb0] sm:$0xf]
    %v80 = vld [vmem:[#allocation5 + $0xb4] sm:$0xff]
    %v81 = vld [vmem:[#allocation5 + $0xbc] sm:$0xff]
    %v82 = vld [vmem:[#allocation5 + $0xc4] sm:$0xff]
    %v83 = vld [vmem:[#allocation5 + $0xcc] sm:$0xff]
    %v84 = vld [vmem:[#allocation5 + $0xd4] sm:$0xf]
    %v85 = vld [vmem:[#allocation5 + $0xd8] sm:$0xff]
    %v86 = vld [vmem:[#allocation5 + $0xe0] sm:$0xff]
    %v87 = vld [vmem:[#allocation5 + $0xe8] sm:$0xff]
    %v88 = vld [vmem:[#allocation5 + $0xf0] sm:$0xff]
    %v89 = vld [vmem:[#allocation5 + $0xf8] sm:$0xf]
    %v90 = vld [vmem:[#allocation5 + $0xfc] sm:$0xff]
    %v91 = vld [vmem:[#allocation5 + $0x104] sm:$0xff]
    %v92 = vld [vmem:[#allocation5 + $0x10c] sm:$0xff]
    %v93 = vld [vmem:[#allocation5 + $0x114] sm:$0xff]
    %v94 = vld [vmem:[#allocation5 + $0x11c] sm:$0xf]
    %v95 = vld [vmem:[#allocation5 + $0x120] sm:$0xff]
    %v96 = vld [vmem:[#allocation5 + $0x128] sm:$0xff]
    %v97 = vld [vmem:[#allocation5 + $0x130] sm:$0xff]
    %v98 = vld [vmem:[#allocation5 + $0x138] sm:$0xff]
    %v99 = vld [vmem:[#allocation5 + $0x140] sm:$0xf]
    %v100 = vld [vmem:[#allocation5 + $0x144] sm:$0xff]
    %v101 = vld [vmem:[#allocation5 + $0x14c] sm:$0xff]
    %v102 = vld [vmem:[#allocation5 + $0x154] sm:$0xff]
    %v103 = vld [vmem:[#allocation5 + $0x15c] sm:$0xff]
    %v104 = vld [vmem:[#allocation5 + $0x164] sm:$0xf]
    %v105 = vld [vmem:[#allocation5 + $0x168] sm:$0xff]
    %v106 = vld [vmem:[#allocation5 + $0x170] sm:$0xff]
    %v107 = vld [vmem:[#allocation5 + $0x178] sm:$0xff]
    %v108 = vld [vmem:[#allocation5 + $0x180] sm:$0xff]
    %v109 = vld [vmem:[#allocation5 + $0x188] sm:$0xf]
    %v110 = vld [vmem:[#allocation5 + $0x18c] sm:$0xff]
    %v111 = vld [vmem:[#allocation5 + $0x194] sm:$0xff]
    %v112 = vld [vmem:[#allocation5 + $0x19c] sm:$0xff]
    %v113 = vld [vmem:[#allocation5 + $0x1a4] sm:$0xff]
    %v114 = vld [vmem:[#allocation5 + $0x1ac] sm:$0xf]
    %v115 = vld [vmem:[#allocation5 + $0x1b0] sm:$0xff]
    %v116 = vld [vmem:[#allocation5 + $0x1b8] sm:$0xff]
    %v117 = vld [vmem:[#allocation5 + $0x1c0] sm:$0xff]
    %v118 = vld [vmem:[#allocation5 + $0x1c8] sm:$0xff]
    %v119 = vld [vmem:[#allocation5 + $0x1d0] sm:$0xf]
    %v120 = vld [vmem:[#allocation5 + $0x1d4] sm:$0xff]
    %v121 = vld [vmem:[#allocation5 + $0x1dc] sm:$0xff]
    %v122 = vld [vmem:[#allocation5 + $0x1e4] sm:$0xff]
    %v123 = vld [vmem:[#allocation5 + $0x1ec] sm:$0xff]
    %v124 = vld [vmem:[#allocation5 + $0x1f4] sm:$0xf]
    %v125 = vld [vmem:[#allocation5 + $0x1f8] sm:$0xff]
    %v126 = vld [vmem:[#allocation5 + $0x200] sm:$0xff]
    %v127 = vld [vmem:[#allocation5 + $0x208] sm:$0xff]
    %v128 = vld [vmem:[#allocation5 + $0x210] sm:$0xff]
    %v129 = vld [vmem:[#allocation5 + $0x218] sm:$0xf]
    %v130 = vld [vmem:[#allocation5 + $0x21c] sm:$0xff]
    %v131 = vld [vmem:[#allocation5 + $0x224] sm:$0xff]
    %v132 = vld [vmem:[#allocation5 + $0x22c] sm:$0xff]
    %v133 = vld [vmem:[#allocation5 + $0x234] sm:$0xff]
    %v134 = vld [vmem:[#allocation5 + $0x23c] sm:$0xf]
    %v135 = vld [vmem:[#allocation5 + $0x240] sm:$0xff]
    %v136 = vld [vmem:[#allocation5 + $0x248] sm:$0xff]
    %v137 = vld [vmem:[#allocation5 + $0x250] sm:$0xff]
    %v138 = vld [vmem:[#allocation5 + $0x258] sm:$0xff]
    %v139 = vld [vmem:[#allocation5 + $0x260] sm:$0xf]
    %v140 = vld [vmem:[#allocation5 + $0x264] sm:$0xff]
    %v141 = vld [vmem:[#allocation5 + $0x26c] sm:$0xff]
    %v142 = vld [vmem:[#allocation5 + $0x274] sm:$0xff]
    %v143 = vld [vmem:[#allocation5 + $0x27c] sm:$0xff]
    %v144 = vld [vmem:[#allocation5 + $0x284] sm:$0xf]
    %v145 = vld [vmem:[#allocation5 + $0x288] sm:$0xff]
    %v146 = vld [vmem:[#allocation5 + $0x290] sm:$0xff]
    %v147 = vld [vmem:[#allocation5 + $0x298] sm:$0xff]
    %v148 = vld [vmem:[#allocation5 + $0x2a0] sm:$0xff]
    %v149 = vld [vmem:[#allocation5 + $0x2a8] sm:$0xf]
    %v150 = vld [vmem:[#allocation5 + $0x2ac] sm:$0xff]
    %v151 = vld [vmem:[#allocation5 + $0x2b4] sm:$0xff]
    %v152 = vld [vmem:[#allocation5 + $0x2bc] sm:$0xff]
    %v153 = vld [vmem:[#allocation5 + $0x2c4] sm:$0xff]
    %v154 = vld [vmem:[#allocation5 + $0x2cc] sm:$0xf]
    %v155 = vld [vmem:[#allocation5 + $0x2d0] sm:$0xff]
    %v156 = vld [vmem:[#allocation5 + $0x2d8] sm:$0xff]
    %v157 = vld [vmem:[#allocation5 + $0x2e0] sm:$0xff]
    %v158 = vld [vmem:[#allocation5 + $0x2e8] sm:$0xff]
    %v159 = vld [vmem:[#allocation5 + $0x2f0] sm:$0xf]
    %v160 = vld [vmem:[#allocation5 + $0x2f4] sm:$0xff]
    %v161 = vld [vmem:[#allocation5 + $0x2fc] sm:$0xff]
    %v162 = vld [vmem:[#allocation5 + $0x304] sm:$0xff]
    %v163 = vld [vmem:[#allocation5 + $0x30c] sm:$0xff]
    %v164 = vld [vmem:[#allocation5 + $0x314] sm:$0xf]
    %v165 = vld [vmem:[#allocation5 + $0x318] sm:$0xff]
    %v166 = vld [vmem:[#allocation5 + $0x320] sm:$0xff]
    %v167 = vld [vmem:[#allocation5 + $0x328] sm:$0xff]
    %v168 = vld [vmem:[#allocation5 + $0x330] sm:$0xff]
    %v169 = vld [vmem:[#allocation5 + $0x338] sm:$0xf]
    %v170 = vld [vmem:[#allocation5 + $0x33c] sm:$0xff]
    %v171 = vld [vmem:[#allocation5 + $0x344] sm:$0xff]
    %v172 = vld [vmem:[#allocation5 + $0x34c] sm:$0xff]
    %v173 = vld [vmem:[#allocation5 + $0x354] sm:$0xff]
    %v174 = vld [vmem:[#allocation5 + $0x35c] sm:$0xf]
    %v175 = vld [vmem:[#allocation5 + $0x360] sm:$0xff]
    %v176 = vld [vmem:[#allocation5 + $0x368] sm:$0xff]
    %v177 = vld [vmem:[#allocation5 + $0x370] sm:$0xff]
    %v178 = vld [vmem:[#allocation5 + $0x378] sm:$0xff]
    %v179 = vld [vmem:[#allocation5 + $0x380] sm:$0xf]
    %v180 = vld [vmem:[#allocation5 + $0x384] sm:$0xff]
    %v181 = vld [vmem:[#allocation5 + $0x38c] sm:$0xff]
    %v182 = vld [vmem:[#allocation5 + $0x394] sm:$0xff]
    %v183 = vld [vmem:[#allocation5 + $0x39c] sm:$0xff]
    %v184 = vld [vmem:[#allocation5 + $0x3a4] sm:$0xf]
    %v185 = vld [vmem:[#allocation5 + $0x3a8] sm:$0xff]
    %v186 = vld [vmem:[#allocation5 + $0x3b0] sm:$0xff]
    %v187 = vld [vmem:[#allocation5 + $0x3b8] sm:$0xff]
    %v188 = vld [vmem:[#allocation5 + $0x3c0] sm:$0xff]
    %v189 = vld [vmem:[#allocation5 + $0x3c8] sm:$0xf]
    %v190 = vld [vmem:[#allocation5 + $0x3cc] sm:$0xff]
    %v191 = vld [vmem:[#allocation5 + $0x3d4] sm:$0xff]
    %v192 = vld [vmem:[#allocation5 + $0x3dc] sm:$0xff]
    %v193 = vld [vmem:[#allocation5 + $0x3e4] sm:$0xff]
    %v194 = vld [vmem:[#allocation5 + $0x3ec] sm:$0xf]
    %v195 = vld [vmem:[#allocation5 + $0x3f0] sm:$0xff]
    %v196 = vld [vmem:[#allocation5 + $0x3f8] sm:$0xff]
    %v197 = vld [vmem:[#allocation5 + $0x400] sm:$0xff]
    %v198 = vld [vmem:[#allocation5 + $0x408] sm:$0xff]
    %v199 = vld [vmem:[#allocation5 + $0x410] sm:$0xf]
    %v200 = vld [vmem:[#allocation5 + $0x414] sm:$0xff]
    %v201 = vld [vmem:[#allocation5 + $0x41c] sm:$0xff]
    %v202 = vld [vmem:[#allocation5 + $0x424] sm:$0xff]
    %v203 = vld [vmem:[#allocation5 + $0x42c] sm:$0xff]
    %v204 = vld [vmem:[#allocation5 + $0x434] sm:$0xf]
    %v205 = vld [vmem:[#allocation5 + $0x438] sm:$0xff]
    %v206 = vld [vmem:[#allocation5 + $0x440] sm:$0xff]
    %v207 = vld [vmem:[#allocation5 + $0x448] sm:$0xff]
    %v208 = vld [vmem:[#allocation5 + $0x450] sm:$0xff]
    %v209 = vld [vmem:[#allocation5 + $0x458] sm:$0xf]
    %v210 = vld [vmem:[#allocation5 + $0x45c] sm:$0xff]
    %v211 = vld [vmem:[#allocation5 + $0x464] sm:$0xff]
    %v212 = vld [vmem:[#allocation5 + $0x46c] sm:$0xff]
    %v213 = vld [vmem:[#allocation5 + $0x474] sm:$0xff]
    %v214 = vld [vmem:[#allocation5 + $0x47c] sm:$0xf]
    %v215 = vld [vmem:[#allocation5 + $0x480] sm:$0xff]
    %v216 = vld [vmem:[#allocation5 + $0x488] sm:$0xff]
    %v217 = vld [vmem:[#allocation5 + $0x490] sm:$0xff]
    %v218 = vld [vmem:[#allocation5 + $0x498] sm:$0xff]
    %v219 = vld [vmem:[#allocation5 + $0x4a0] sm:$0xf]
    %v220 = vld [vmem:[#allocation5 + $0x4a4] sm:$0xff]
    %v221 = vld [vmem:[#allocation5 + $0x4ac] sm:$0xff]
    %v222 = vld [vmem:[#allocation5 + $0x4b4] sm:$0xff]
    %v223 = vld [vmem:[#allocation5 + $0x4bc] sm:$0xff]
    %v224 = vld [vmem:[#allocation5 + $0x4c4] sm:$0xf]
    %v225 = vld [vmem:[#allocation5 + $0x4c8] sm:$0xff]
    %v226 = vld [vmem:[#allocation5 + $0x4d0] sm:$0xff]
    %v227 = vld [vmem:[#allocation5 + $0x4d8] sm:$0xff]
    %v228 = vld [vmem:[#allocation5 + $0x4e0] sm:$0xff]
    %v229 = vld [vmem:[#allocation5 + $0x4e8] sm:$0xf]
    %v230 = vld [vmem:[#allocation5 + $0x4ec] sm:$0xff]
    %v231 = vld [vmem:[#allocation5 + $0x4f4] sm:$0xff]
    %v232 = vld [vmem:[#allocation5 + $0x4fc] sm:$0xff]
    %v233 = vld [vmem:[#allocation5 + $0x504] sm:$0xff]
    %v234 = vld [vmem:[#allocation5 + $0x50c] sm:$0xf]
    %v235 = vld [vmem:[#allocation5 + $0x510] sm:$0xff]
    %v236 = vld [vmem:[#allocation5 + $0x518] sm:$0xff]
    %v237 = vld [vmem:[#allocation5 + $0x520] sm:$0xff]
    %v238 = vld [vmem:[#allocation5 + $0x528] sm:$0xff]
    %v239 = vld [vmem:[#allocation5 + $0x530] sm:$0xf]
    %v240 = vld [vmem:[#allocation5 + $0x534] sm:$0xff]
    %v241 = vld [vmem:[#allocation5 + $0x53c] sm:$0xff]
    %v242 = vld [vmem:[#allocation5 + $0x544] sm:$0xff]
    %v243 = vld [vmem:[#allocation5 + $0x54c] sm:$0xff]
    %v244 = vld [vmem:[#allocation5 + $0x554] sm:$0xf]
    %v245 = vld [vmem:[#allocation5 + $0x558] sm:$0xff]
    %v246 = vld [vmem:[#allocation5 + $0x560] sm:$0xff]
    %v247 = vld [vmem:[#allocation5 + $0x568] sm:$0xff]
    %v248 = vld [vmem:[#allocation5 + $0x570] sm:$0xff]
    %v249 = vld [vmem:[#allocation5 + $0x578] sm:$0xf]
    %v250 = vld [vmem:[#allocation5 + $0x57c] sm:$0xff]
    %v251 = vld [vmem:[#allocation5 + $0x584] sm:$0xff]
    %v252 = vld [vmem:[#allocation5 + $0x58c] sm:$0xff]
    %v253 = vld [vmem:[#allocation5 + $0x594] sm:$0xff]
    %v254 = vld [vmem:[#allocation5 + $0x59c] sm:$0xf]
    %v255 = vld [vmem:[#allocation5 + $0x5a0] sm:$0xff]
    %v256 = vld [vmem:[#allocation5 + $0x5a8] sm:$0xff]
    %v257 = vld [vmem:[#allocation5 + $0x5b0] sm:$0xff]
    %v258 = vld [vmem:[#allocation5 + $0x5b8] sm:$0xff]
    %v259 = vld [vmem:[#allocation5 + $0x5c0] sm:$0xf]
    %v260 = vld [vmem:[#allocation5 + $0x5c4] sm:$0xff]
    %v261 = vld [vmem:[#allocation5 + $0x5cc] sm:$0xff]
    %v262 = vld [vmem:[#allocation5 + $0x5d4] sm:$0xff]
    %v263 = vld [vmem:[#allocation5 + $0x5dc] sm:$0xff]
    %v264 = vld [vmem:[#allocation5 + $0x5e4] sm:$0xf]
    %v265 = vld [vmem:[#allocation5 + $0x5e8] sm:$0xff]
    %v266 = vld [vmem:[#allocation5 + $0x5f0] sm:$0xff]
    %v267 = vld [vmem:[#allocation5 + $0x5f8] sm:$0xff]
    %v268 = vld [vmem:[#allocation5 + $0x600] sm:$0xff]
    %v269 = vld [vmem:[#allocation5 + $0x608] sm:$0xf]
    %v270 = vld [vmem:[#allocation5 + $0x60c] sm:$0xff]
    %v271 = vld [vmem:[#allocation5 + $0x614] sm:$0xff]
    %v272 = vld [vmem:[#allocation5 + $0x61c] sm:$0xff]
    %v273 = vld [vmem:[#allocation5 + $0x624] sm:$0xff]
    %v274 = vld [vmem:[#allocation5 + $0x62c] sm:$0xf]
    %v275 = vld [vmem:[#allocation5 + $0x630] sm:$0xff]
    %v276 = vld [vmem:[#allocation5 + $0x638] sm:$0xff]
    %v277 = vld [vmem:[#allocation5 + $0x640] sm:$0xff]
    %v278 = vld [vmem:[#allocation5 + $0x648] sm:$0xff]
    %v279 = vld [vmem:[#allocation5 + $0x650] sm:$0xf]
    %v280 = vld [vmem:[#allocation5 + $0x654] sm:$0xff]
    %v281 = vld [vmem:[#allocation5 + $0x65c] sm:$0xff]
    %v282 = vld [vmem:[#allocation5 + $0x664] sm:$0xff]
    %v283 = vld [vmem:[#allocation5 + $0x66c] sm:$0xff]
    %v284 = vld [vmem:[#allocation5 + $0x674] sm:$0xf]
    %v285 = vld [vmem:[#allocation5 + $0x678] sm:$0xff]
    %v286 = vld [vmem:[#allocation5 + $0x680] sm:$0xff]
    %v287 = vld [vmem:[#allocation5 + $0x688] sm:$0xff]
    %v288 = vld [vmem:[#allocation5 + $0x690] sm:$0xff]
    %v289 = vld [vmem:[#allocation5 + $0x698] sm:$0xf]
    %v290 = vld [vmem:[#allocation5 + $0x69c] sm:$0xff]
    %v291 = vld [vmem:[#allocation5 + $0x6a4] sm:$0xff]
    %v292 = vld [vmem:[#allocation5 + $0x6ac] sm:$0xff]
    %v293 = vld [vmem:[#allocation5 + $0x6b4] sm:$0xff]
    %v294 = vld [vmem:[#allocation5 + $0x6bc] sm:$0xf]
    %v295 = vld [vmem:[#allocation5 + $0x6c0] sm:$0xff]
    %v296 = vld [vmem:[#allocation5 + $0x6c8] sm:$0xff]
    %v297 = vld [vmem:[#allocation5 + $0x6d0] sm:$0xff]
    %v298 = vld [vmem:[#allocation5 + $0x6d8] sm:$0xff]
    %v299 = vld [vmem:[#allocation5 + $0x6e0] sm:$0xf]
    %v300 = vld [vmem:[#allocation5 + $0x6e4] sm:$0xff]
    %v301 = vld [vmem:[#allocation5 + $0x6ec] sm:$0xff]
    %v302 = vld [vmem:[#allocation5 + $0x6f4] sm:$0xff]
    %v303 = vld [vmem:[#allocation5 + $0x6fc] sm:$0xff]
    %v304 = vld [vmem:[#allocation5 + $0x704] sm:$0xf]
    %v305 = vld [vmem:[#allocation5 + $0x708] sm:$0xff]
    %v306 = vld [vmem:[#allocation5 + $0x710] sm:$0xff]
    %v307 = vld [vmem:[#allocation5 + $0x718] sm:$0xff]
    %v308 = vld [vmem:[#allocation5 + $0x720] sm:$0xff]
    %v309 = vld [vmem:[#allocation5 + $0x728] sm:$0xf]
    %v310 = vld [vmem:[#allocation5 + $0x72c] sm:$0xff]
    %v311 = vld [vmem:[#allocation5 + $0x734] sm:$0xff]
    %v312 = vld [vmem:[#allocation5 + $0x73c] sm:$0xff]
    %v313 = vld [vmem:[#allocation5 + $0x744] sm:$0xff]
    %v314 = vld [vmem:[#allocation5 + $0x74c] sm:$0xf]
    %v315 = vld [vmem:[#allocation5 + $0x750] sm:$0xff]
    %v316 = vld [vmem:[#allocation5 + $0x758] sm:$0xff]
    %v317 = vld [vmem:[#allocation5 + $0x760] sm:$0xff]
    %v318 = vld [vmem:[#allocation5 + $0x768] sm:$0xff]
    %v319 = vld [vmem:[#allocation5 + $0x770] sm:$0xf]
    %v320 = vld [vmem:[#allocation5 + $0x774] sm:$0xff]
    %v321 = vld [vmem:[#allocation5 + $0x77c] sm:$0xff]
    %v322 = vld [vmem:[#allocation5 + $0x784] sm:$0xff]
    %v323 = vld [vmem:[#allocation5 + $0x78c] sm:$0xff]
    %v324 = vld [vmem:[#allocation5 + $0x794] sm:$0xf]
    %v325 = vld [vmem:[#allocation5 + $0x798] sm:$0xff]
    %v326 = vld [vmem:[#allocation5 + $0x7a0] sm:$0xff]
    %v327 = vld [vmem:[#allocation5 + $0x7a8] sm:$0xff]
    %v328 = vld [vmem:[#allocation5 + $0x7b0] sm:$0xff]
    %v329 = vld [vmem:[#allocation5 + $0x7b8] sm:$0xf]
    %v330 = vld [vmem:[#allocation5 + $0x7bc] sm:$0xff]
    %v331 = vld [vmem:[#allocation5 + $0x7c4] sm:$0xff]
    %v332 = vld [vmem:[#allocation5 + $0x7cc] sm:$0xff]
    %v333 = vld [vmem:[#allocation5 + $0x7d4] sm:$0xff]
    %v334 = vld [vmem:[#allocation5 + $0x7dc] sm:$0xf]
    %v335 = vld [vmem:[#allocation5 + $0x7e0] sm:$0xff]
    %v336 = vld [vmem:[#allocation5 + $0x7e8] sm:$0xff]
    %v337 = vld [vmem:[#allocation5 + $0x7f0] sm:$0xff]
    %v338 = vld [vmem:[#allocation5 + $0x7f8] sm:$0xff]
    %v339 = vld [vmem:[#allocation5 + $0x800] sm:$0xf]
    %v340 = vld [vmem:[#allocation5 + $0x804] sm:$0xff]
    %v341 = vld [vmem:[#allocation5 + $0x80c] sm:$0xff]
    %v342 = vld [vmem:[#allocation5 + $0x814] sm:$0xff]
    %v343 = vld [vmem:[#allocation5 + $0x81c] sm:$0xff]
    %v344 = vld [vmem:[#allocation5 + $0x824] sm:$0xf]
    %v345 = vld [vmem:[#allocation5 + $0x828] sm:$0xff]
    %v346 = vld [vmem:[#allocation5 + $0x830] sm:$0xff]
    %v347 = vld [vmem:[#allocation5 + $0x838] sm:$0xff]
    %v348 = vld [vmem:[#allocation5 + $0x840] sm:$0xff]
    %v349 = vld [vmem:[#allocation5 + $0x848] sm:$0xf]
    %v350 = vld [vmem:[#allocation5 + $0x84c] sm:$0xff]
    %v351 = vld [vmem:[#allocation5 + $0x854] sm:$0xff]
    %v352 = vld [vmem:[#allocation5 + $0x85c] sm:$0xff]
    %v353 = vld [vmem:[#allocation5 + $0x864] sm:$0xff]
    %v354 = vld [vmem:[#allocation5 + $0x86c] sm:$0xf]
    %v355 = vld [vmem:[#allocation5 + $0x870] sm:$0xff]
    %v356 = vld [vmem:[#allocation5 + $0x878] sm:$0xff]
    %v357 = vld [vmem:[#allocation5 + $0x880] sm:$0xff]
    %v358 = vld [vmem:[#allocation5 + $0x888] sm:$0xff]
    %v359 = vld [vmem:[#allocation5 + $0x890] sm:$0xf]
    %v360 = vld [vmem:[#allocation5 + $0x894] sm:$0xff]
    %v361 = vld [vmem:[#allocation5 + $0x89c] sm:$0xff]
    %v362 = vld [vmem:[#allocation5 + $0x8a4] sm:$0xff]
    %v363 = vld [vmem:[#allocation5 + $0x8ac] sm:$0xff]
    %v364 = vld [vmem:[#allocation5 + $0x8b4] sm:$0xf]
    %v365 = vld [vmem:[#allocation5 + $0x8b8] sm:$0xff]
    %v366 = vld [vmem:[#allocation5 + $0x8c0] sm:$0xff]
    %v367 = vld [vmem:[#allocation5 + $0x8c8] sm:$0xff]
    %v368 = vld [vmem:[#allocation5 + $0x8d0] sm:$0xff]
    %v369 = vld [vmem:[#allocation5 + $0x8d8] sm:$0xf]
    %v370 = vld [vmem:[#allocation5 + $0x8dc] sm:$0xff]
    %v371 = vld [vmem:[#allocation5 + $0x8e4] sm:$0xff]
    %v372 = vld [vmem:[#allocation5 + $0x8ec] sm:$0xff]
    %v373 = vld [vmem:[#allocation5 + $0x8f4] sm:$0xff]
    %v374 = vld [vmem:[#allocation5 + $0x8fc] sm:$0xf]
    %v375 = vld [vmem:[#allocation7] sm:$0xff]
    %v376 = vld [vmem:[#allocation7 + $0x8] sm:$0x1]
    %v379 = vlaneseq
    %v380 = vshrl.u32 %v379, 7
    %v381 = vsub.s32 0, %v380
    %v382 = vrot.slane %v375, %v381
    %v383 = vlaneseq
    %v384 = vshrl.u32 %v383, 7
    %v385 = vsub.s32 1, %v384
    %v386 = vrot.slane %v375, %v385
    %v387 = vlaneseq
    %v388 = vshrl.u32 %v387, 7
    %v389 = vsub.s32 2, %v388
    %v390 = vrot.slane %v375, %v389
    %v391 = vlaneseq
    %v392 = vshrl.u32 %v391, 7
    %v393 = vsub.s32 3, %v392
    %v394 = vrot.slane %v375, %v393
    %v395 = vlaneseq
    %v396 = vshrl.u32 %v395, 7
    %v397 = vsub.s32 4, %v396
    %v398 = vrot.slane %v375, %v397
    %v399 = vlaneseq
    %v400 = vshrl.u32 %v399, 7
    %v401 = vsub.s32 5, %v400
    %v402 = vrot.slane %v375, %v401
    %v403 = vlaneseq
    %v404 = vshrl.u32 %v403, 7
    %v405 = vsub.s32 6, %v404
    %v406 = vrot.slane %v375, %v405
    %v407 = vlaneseq
    %v408 = vshrl.u32 %v407, 7
    %v409 = vsub.s32 7, %v408
    %v410 = vrot.slane %v375, %v409
    %v411 = vlaneseq
    %v412 = vshrl.u32 %v411, 7
    %v413 = vsub.s32 0, %v412
    %v414 = vrot.slane %v376, %v413
    %v426 = vunpack.c.l.b16 %v53
    %v427 = vunpack.c.h.b16 %v53
    %v428 = vunpack.c.l.b16 %v54
    %v429 = vunpack.c.h.b16 %v54
    %v430 = vpack.c.b16 %v426, %v426
    %v431 = vpack.c.b16 %v427, %v427
    %v432 = vpack.c.b16 %v428, %v428
    %v433 = vpack.c.b16 %v429, %v429
    %v758 = vunpack.c.l.b16 %v55
    %v759 = vunpack.c.h.b16 %v55
    %v760 = vunpack.c.l.b16 %v56
    %v761 = vunpack.c.h.b16 %v56
    %v762 = vunpack.c.l.b16 %v57
    %v763 = vunpack.c.h.b16 %v57
    %v764 = vunpack.c.l.b16 %v58
    %v765 = vunpack.c.h.b16 %v58
    %v766 = vunpack.c.l.b16 %v59
    %v767 = vunpack.c.l.b16 %v60
    %v768 = vunpack.c.h.b16 %v60
    %v769 = vunpack.c.l.b16 %v61
    %v770 = vunpack.c.h.b16 %v61
    %v771 = vunpack.c.l.b16 %v62
    %v772 = vunpack.c.h.b16 %v62
    %v773 = vunpack.c.l.b16 %v63
    %v774 = vunpack.c.h.b16 %v63
    %v775 = vunpack.c.l.b16 %v64
    %v776 = vunpack.c.l.b16 %v65
    %v777 = vunpack.c.h.b16 %v65
    %v778 = vunpack.c.l.b16 %v66
    %v779 = vunpack.c.h.b16 %v66
    %v780 = vunpack.c.l.b16 %v67
    %v781 = vunpack.c.h.b16 %v67
    %v782 = vunpack.c.l.b16 %v68
    %v783 = vunpack.c.h.b16 %v68
    %v784 = vunpack.c.l.b16 %v69
    %v785 = vunpack.c.l.b16 %v70
    %v786 = vunpack.c.h.b16 %v70
    %v787 = vunpack.c.l.b16 %v71
    %v788 = vunpack.c.h.b16 %v71
    %v789 = vunpack.c.l.b16 %v72
    %v790 = vunpack.c.h.b16 %v72
    %v791 = vunpack.c.l.b16 %v73
    %v792 = vunpack.c.h.b16 %v73
    %v793 = vunpack.c.l.b16 %v74
    %v794 = vunpack.c.l.b16 %v75
    %v795 = vunpack.c.h.b16 %v75
    %v796 = vunpack.c.l.b16 %v76
    %v797 = vunpack.c.h.b16 %v76
    %v798 = vunpack.c.l.b16 %v77
    %v799 = vunpack.c.h.b16 %v77
    %v800 = vunpack.c.l.b16 %v78
    %v801 = vunpack.c.h.b16 %v78
    %v802 = vunpack.c.l.b16 %v79
    %v803 = vunpack.c.l.b16 %v80
    %v804 = vunpack.c.h.b16 %v80
    %v805 = vunpack.c.l.b16 %v81
    %v806 = vunpack.c.h.b16 %v81
    %v807 = vunpack.c.l.b16 %v82
    %v808 = vunpack.c.h.b16 %v82
    %v809 = vunpack.c.l.b16 %v83
    %v810 = vunpack.c.h.b16 %v83
    %v811 = vunpack.c.l.b16 %v84
    %v812 = vunpack.c.l.b16 %v85
    %v813 = vunpack.c.h.b16 %v85
    %v814 = vunpack.c.l.b16 %v86
    %v815 = vunpack.c.h.b16 %v86
    %v816 = vunpack.c.l.b16 %v87
    %v817 = vunpack.c.h.b16 %v87
    %v818 = vunpack.c.l.b16 %v88
    %v819 = vunpack.c.h.b16 %v88
    %v820 = vunpack.c.l.b16 %v89
    %v821 = vunpack.c.l.b16 %v90
    %v822 = vunpack.c.h.b16 %v90
    %v823 = vunpack.c.l.b16 %v91
    %v824 = vunpack.c.h.b16 %v91
    %v825 = vunpack.c.l.b16 %v92
    %v826 = vunpack.c.h.b16 %v92
    %v827 = vunpack.c.l.b16 %v93
    %v828 = vunpack.c.h.b16 %v93
    %v829 = vunpack.c.l.b16 %v94
    %v830 = vunpack.c.l.b16 %v95
    %v831 = vunpack.c.h.b16 %v95
    %v832 = vunpack.c.l.b16 %v96
    %v833 = vunpack.c.h.b16 %v96
    %v834 = vunpack.c.l.b16 %v97
    %v835 = vunpack.c.h.b16 %v97
    %v836 = vunpack.c.l.b16 %v98
    %v837 = vunpack.c.h.b16 %v98
    %v838 = vunpack.c.l.b16 %v99
    %v839 = vunpack.c.l.b16 %v100
    %v840 = vunpack.c.h.b16 %v100
    %v841 = vunpack.c.l.b16 %v101
    %v842 = vunpack.c.h.b16 %v101
    %v843 = vunpack.c.l.b16 %v102
    %v844 = vunpack.c.h.b16 %v102
    %v845 = vunpack.c.l.b16 %v103
    %v846 = vunpack.c.h.b16 %v103
    %v847 = vunpack.c.l.b16 %v104
    %v848 = vunpack.c.l.b16 %v105
    %v849 = vunpack.c.h.b16 %v105
    %v850 = vunpack.c.l.b16 %v106
    %v851 = vunpack.c.h.b16 %v106
    %v852 = vunpack.c.l.b16 %v107
    %v853 = vunpack.c.h.b16 %v107
    %v854 = vunpack.c.l.b16 %v108
    %v855 = vunpack.c.h.b16 %v108
    %v856 = vunpack.c.l.b16 %v109
    %v857 = vunpack.c.l.b16 %v110
    %v858 = vunpack.c.h.b16 %v110
    %v859 = vunpack.c.l.b16 %v111
    %v860 = vunpack.c.h.b16 %v111
    %v861 = vunpack.c.l.b16 %v112
    %v862 = vunpack.c.h.b16 %v112
    %v863 = vunpack.c.l.b16 %v113
    %v864 = vunpack.c.h.b16 %v113
    %v865 = vunpack.c.l.b16 %v114
    %v866 = vunpack.c.l.b16 %v115
    %v867 = vunpack.c.h.b16 %v115
    %v868 = vunpack.c.l.b16 %v116
    %v869 = vunpack.c.h.b16 %v116
    %v870 = vunpack.c.l.b16 %v117
    %v871 = vunpack.c.h.b16 %v117
    %v872 = vunpack.c.l.b16 %v118
    %v873 = vunpack.c.h.b16 %v118
    %v874 = vunpack.c.l.b16 %v119
    %v875 = vunpack.c.l.b16 %v120
    %v876 = vunpack.c.h.b16 %v120
    %v877 = vunpack.c.l.b16 %v121
    %v878 = vunpack.c.h.b16 %v121
    %v879 = vunpack.c.l.b16 %v122
    %v880 = vunpack.c.h.b16 %v122
    %v881 = vunpack.c.l.b16 %v123
    %v882 = vunpack.c.h.b16 %v123
    %v883 = vunpack.c.l.b16 %v124
    %v884 = vunpack.c.l.b16 %v125
    %v885 = vunpack.c.h.b16 %v125
    %v886 = vunpack.c.l.b16 %v126
    %v887 = vunpack.c.h.b16 %v126
    %v888 = vunpack.c.l.b16 %v127
    %v889 = vunpack.c.h.b16 %v127
    %v890 = vunpack.c.l.b16 %v128
    %v891 = vunpack.c.h.b16 %v128
    %v892 = vunpack.c.l.b16 %v129
    %v893 = vunpack.c.l.b16 %v130
    %v894 = vunpack.c.h.b16 %v130
    %v895 = vunpack.c.l.b16 %v131
    %v896 = vunpack.c.h.b16 %v131
    %v897 = vunpack.c.l.b16 %v132
    %v898 = vunpack.c.h.b16 %v132
    %v899 = vunpack.c.l.b16 %v133
    %v900 = vunpack.c.h.b16 %v133
    %v901 = vunpack.c.l.b16 %v134
    %v902 = vunpack.c.l.b16 %v135
    %v903 = vunpack.c.h.b16 %v135
    %v904 = vunpack.c.l.b16 %v136
    %v905 = vunpack.c.h.b16 %v136
    %v906 = vunpack.c.l.b16 %v137
    %v907 = vunpack.c.h.b16 %v137
    %v908 = vunpack.c.l.b16 %v138
    %v909 = vunpack.c.h.b16 %v138
    %v910 = vunpack.c.l.b16 %v139
    %v911 = vunpack.c.l.b16 %v140
    %v912 = vunpack.c.h.b16 %v140
    %v913 = vunpack.c.l.b16 %v141
    %v914 = vunpack.c.h.b16 %v141
    %v915 = vunpack.c.l.b16 %v142
    %v916 = vunpack.c.h.b16 %v142
    %v917 = vunpack.c.l.b16 %v143
    %v918 = vunpack.c.h.b16 %v143
    %v919 = vunpack.c.l.b16 %v144
    %v920 = vunpack.c.l.b16 %v145
    %v921 = vunpack.c.h.b16 %v145
    %v922 = vunpack.c.l.b16 %v146
    %v923 = vunpack.c.h.b16 %v146
    %v924 = vunpack.c.l.b16 %v147
    %v925 = vunpack.c.h.b16 %v147
    %v926 = vunpack.c.l.b16 %v148
    %v927 = vunpack.c.h.b16 %v148
    %v928 = vunpack.c.l.b16 %v149
    %v929 = vunpack.c.l.b16 %v150
    %v930 = vunpack.c.h.b16 %v150
    %v931 = vunpack.c.l.b16 %v151
    %v932 = vunpack.c.h.b16 %v151
    %v933 = vunpack.c.l.b16 %v152
    %v934 = vunpack.c.h.b16 %v152
    %v935 = vunpack.c.l.b16 %v153
    %v936 = vunpack.c.h.b16 %v153
    %v937 = vunpack.c.l.b16 %v154
    %v938 = vunpack.c.l.b16 %v155
    %v939 = vunpack.c.h.b16 %v155
    %v940 = vunpack.c.l.b16 %v156
    %v941 = vunpack.c.h.b16 %v156
    %v942 = vunpack.c.l.b16 %v157
    %v943 = vunpack.c.h.b16 %v157
    %v944 = vunpack.c.l.b16 %v158
    %v945 = vunpack.c.h.b16 %v158
    %v946 = vunpack.c.l.b16 %v159
    %v947 = vunpack.c.l.b16 %v160
    %v948 = vunpack.c.h.b16 %v160
    %v949 = vunpack.c.l.b16 %v161
    %v950 = vunpack.c.h.b16 %v161
    %v951 = vunpack.c.l.b16 %v162
    %v952 = vunpack.c.h.b16 %v162
    %v953 = vunpack.c.l.b16 %v163
    %v954 = vunpack.c.h.b16 %v163
    %v955 = vunpack.c.l.b16 %v164
    %v956 = vunpack.c.l.b16 %v165
    %v957 = vunpack.c.h.b16 %v165
    %v958 = vunpack.c.l.b16 %v166
    %v959 = vunpack.c.h.b16 %v166
    %v960 = vunpack.c.l.b16 %v167
    %v961 = vunpack.c.h.b16 %v167
    %v962 = vunpack.c.l.b16 %v168
    %v963 = vunpack.c.h.b16 %v168
    %v964 = vunpack.c.l.b16 %v169
    %v965 = vunpack.c.l.b16 %v170
    %v966 = vunpack.c.h.b16 %v170
    %v967 = vunpack.c.l.b16 %v171
    %v968 = vunpack.c.h.b16 %v171
    %v969 = vunpack.c.l.b16 %v172
    %v970 = vunpack.c.h.b16 %v172
    %v971 = vunpack.c.l.b16 %v173
    %v972 = vunpack.c.h.b16 %v173
    %v973 = vunpack.c.l.b16 %v174
    %v974 = vunpack.c.l.b16 %v175
    %v975 = vunpack.c.h.b16 %v175
    %v976 = vunpack.c.l.b16 %v176
    %v977 = vunpack.c.h.b16 %v176
    %v978 = vunpack.c.l.b16 %v177
    %v979 = vunpack.c.h.b16 %v177
    %v980 = vunpack.c.l.b16 %v178
    %v981 = vunpack.c.h.b16 %v178
    %v982 = vunpack.c.l.b16 %v179
    %v983 = vunpack.c.l.b16 %v180
    %v984 = vunpack.c.h.b16 %v180
    %v985 = vunpack.c.l.b16 %v181
    %v986 = vunpack.c.h.b16 %v181
    %v987 = vunpack.c.l.b16 %v182
    %v988 = vunpack.c.h.b16 %v182
    %v989 = vunpack.c.l.b16 %v183
    %v990 = vunpack.c.h.b16 %v183
    %v991 = vunpack.c.l.b16 %v184
    %v992 = vunpack.c.l.b16 %v185
    %v993 = vunpack.c.h.b16 %v185
    %v994 = vunpack.c.l.b16 %v186
    %v995 = vunpack.c.h.b16 %v186
    %v996 = vunpack.c.l.b16 %v187
    %v997 = vunpack.c.h.b16 %v187
    %v998 = vunpack.c.l.b16 %v188
    %v999 = vunpack.c.h.b16 %v188
    %v1000 = vunpack.c.l.b16 %v189
    %v1001 = vunpack.c.l.b16 %v190
    %v1002 = vunpack.c.h.b16 %v190
    %v1003 = vunpack.c.l.b16 %v191
    %v1004 = vunpack.c.h.b16 %v191
    %v1005 = vunpack.c.l.b16 %v192
    %v1006 = vunpack.c.h.b16 %v192
    %v1007 = vunpack.c.l.b16 %v193
    %v1008 = vunpack.c.h.b16 %v193
    %v1009 = vunpack.c.l.b16 %v194
    %v1010 = vunpack.c.l.b16 %v195
    %v1011 = vunpack.c.h.b16 %v195
    %v1012 = vunpack.c.l.b16 %v196
    %v1013 = vunpack.c.h.b16 %v196
    %v1014 = vunpack.c.l.b16 %v197
    %v1015 = vunpack.c.h.b16 %v197
    %v1016 = vunpack.c.l.b16 %v198
    %v1017 = vunpack.c.h.b16 %v198
    %v1018 = vunpack.c.l.b16 %v199
    %v1019 = vunpack.c.l.b16 %v200
    %v1020 = vunpack.c.h.b16 %v200
    %v1021 = vunpack.c.l.b16 %v201
    %v1022 = vunpack.c.h.b16 %v201
    %v1023 = vunpack.c.l.b16 %v202
    %v1024 = vunpack.c.h.b16 %v202
    %v1025 = vunpack.c.l.b16 %v203
    %v1026 = vunpack.c.h.b16 %v203
    %v1027 = vunpack.c.l.b16 %v204
    %v1028 = vunpack.c.l.b16 %v205
    %v1029 = vunpack.c.h.b16 %v205
    %v1030 = vunpack.c.l.b16 %v206
    %v1031 = vunpack.c.h.b16 %v206
    %v1032 = vunpack.c.l.b16 %v207
    %v1033 = vunpack.c.h.b16 %v207
    %v1034 = vunpack.c.l.b16 %v208
    %v1035 = vunpack.c.h.b16 %v208
    %v1036 = vunpack.c.l.b16 %v209
    %v1037 = vunpack.c.l.b16 %v210
    %v1038 = vunpack.c.h.b16 %v210
    %v1039 = vunpack.c.l.b16 %v211
    %v1040 = vunpack.c.h.b16 %v211
    %v1041 = vunpack.c.l.b16 %v212
    %v1042 = vunpack.c.h.b16 %v212
    %v1043 = vunpack.c.l.b16 %v213
    %v1044 = vunpack.c.h.b16 %v213
    %v1045 = vunpack.c.l.b16 %v214
    %v1046 = vunpack.c.l.b16 %v215
    %v1047 = vunpack.c.h.b16 %v215
    %v1048 = vunpack.c.l.b16 %v216
    %v1049 = vunpack.c.h.b16 %v216
    %v1050 = vunpack.c.l.b16 %v217
    %v1051 = vunpack.c.h.b16 %v217
    %v1052 = vunpack.c.l.b16 %v218
    %v1053 = vunpack.c.h.b16 %v218
    %v1054 = vunpack.c.l.b16 %v219
    %v1055 = vunpack.c.l.b16 %v220
    %v1056 = vunpack.c.h.b16 %v220
    %v1057 = vunpack.c.l.b16 %v221
    %v1058 = vunpack.c.h.b16 %v221
    %v1059 = vunpack.c.l.b16 %v222
    %v1060 = vunpack.c.h.b16 %v222
    %v1061 = vunpack.c.l.b16 %v223
    %v1062 = vunpack.c.h.b16 %v223
    %v1063 = vunpack.c.l.b16 %v224
    %v1064 = vunpack.c.l.b16 %v225
    %v1065 = vunpack.c.h.b16 %v225
    %v1066 = vunpack.c.l.b16 %v226
    %v1067 = vunpack.c.h.b16 %v226
    %v1068 = vunpack.c.l.b16 %v227
    %v1069 = vunpack.c.h.b16 %v227
    %v1070 = vunpack.c.l.b16 %v228
    %v1071 = vunpack.c.h.b16 %v228
    %v1072 = vunpack.c.l.b16 %v229
    %v1073 = vunpack.c.l.b16 %v230
    %v1074 = vunpack.c.h.b16 %v230
    %v1075 = vunpack.c.l.b16 %v231
    %v1076 = vunpack.c.h.b16 %v231
    %v1077 = vunpack.c.l.b16 %v232
    %v1078 = vunpack.c.h.b16 %v232
    %v1079 = vunpack.c.l.b16 %v233
    %v1080 = vunpack.c.h.b16 %v233
    %v1081 = vunpack.c.l.b16 %v234
    %v1082 = vunpack.c.l.b16 %v235
    %v1083 = vunpack.c.h.b16 %v235
    %v1084 = vunpack.c.l.b16 %v236
    %v1085 = vunpack.c.h.b16 %v236
    %v1086 = vunpack.c.l.b16 %v237
    %v1087 = vunpack.c.h.b16 %v237
    %v1088 = vunpack.c.l.b16 %v238
    %v1089 = vunpack.c.h.b16 %v238
    %v1090 = vunpack.c.l.b16 %v239
    %v1091 = vunpack.c.l.b16 %v240
    %v1092 = vunpack.c.h.b16 %v240
    %v1093 = vunpack.c.l.b16 %v241
    %v1094 = vunpack.c.h.b16 %v241
    %v1095 = vunpack.c.l.b16 %v242
    %v1096 = vunpack.c.h.b16 %v242
    %v1097 = vunpack.c.l.b16 %v243
    %v1098 = vunpack.c.h.b16 %v243
    %v1099 = vunpack.c.l.b16 %v244
    %v1100 = vunpack.c.l.b16 %v245
    %v1101 = vunpack.c.h.b16 %v245
    %v1102 = vunpack.c.l.b16 %v246
    %v1103 = vunpack.c.h.b16 %v246
    %v1104 = vunpack.c.l.b16 %v247
    %v1105 = vunpack.c.h.b16 %v247
    %v1106 = vunpack.c.l.b16 %v248
    %v1107 = vunpack.c.h.b16 %v248
    %v1108 = vunpack.c.l.b16 %v249
    %v1109 = vunpack.c.l.b16 %v250
    %v1110 = vunpack.c.h.b16 %v250
    %v1111 = vunpack.c.l.b16 %v251
    %v1112 = vunpack.c.h.b16 %v251
    %v1113 = vunpack.c.l.b16 %v252
    %v1114 = vunpack.c.h.b16 %v252
    %v1115 = vunpack.c.l.b16 %v253
    %v1116 = vunpack.c.h.b16 %v253
    %v1117 = vunpack.c.l.b16 %v254
    %v1118 = vunpack.c.l.b16 %v255
    %v1119 = vunpack.c.h.b16 %v255
    %v1120 = vunpack.c.l.b16 %v256
    %v1121 = vunpack.c.h.b16 %v256
    %v1122 = vunpack.c.l.b16 %v257
    %v1123 = vunpack.c.h.b16 %v257
    %v1124 = vunpack.c.l.b16 %v258
    %v1125 = vunpack.c.h.b16 %v258
    %v1126 = vunpack.c.l.b16 %v259
    %v1127 = vunpack.c.l.b16 %v260
    %v1128 = vunpack.c.h.b16 %v260
    %v1129 = vunpack.c.l.b16 %v261
    %v1130 = vunpack.c.h.b16 %v261
    %v1131 = vunpack.c.l.b16 %v262
    %v1132 = vunpack.c.h.b16 %v262
    %v1133 = vunpack.c.l.b16 %v263
    %v1134 = vunpack.c.h.b16 %v263
    %v1135 = vunpack.c.l.b16 %v264
    %v1136 = vunpack.c.l.b16 %v265
    %v1137 = vunpack.c.h.b16 %v265
    %v1138 = vunpack.c.l.b16 %v266
    %v1139 = vunpack.c.h.b16 %v266
    %v1140 = vunpack.c.l.b16 %v267
    %v1141 = vunpack.c.h.b16 %v267
    %v1142 = vunpack.c.l.b16 %v268
    %v1143 = vunpack.c.h.b16 %v268
    %v1144 = vunpack.c.l.b16 %v269
    %v1145 = vunpack.c.l.b16 %v270
    %v1146 = vunpack.c.h.b16 %v270
    %v1147 = vunpack.c.l.b16 %v271
    %v1148 = vunpack.c.h.b16 %v271
    %v1149 = vunpack.c.l.b16 %v272
    %v1150 = vunpack.c.h.b16 %v272
    %v1151 = vunpack.c.l.b16 %v273
    %v1152 = vunpack.c.h.b16 %v273
    %v1153 = vunpack.c.l.b16 %v274
    %v1154 = vunpack.c.l.b16 %v275
    %v1155 = vunpack.c.h.b16 %v275
    %v1156 = vunpack.c.l.b16 %v276
    %v1157 = vunpack.c.h.b16 %v276
    %v1158 = vunpack.c.l.b16 %v277
    %v1159 = vunpack.c.h.b16 %v277
    %v1160 = vunpack.c.l.b16 %v278
    %v1161 = vunpack.c.h.b16 %v278
    %v1162 = vunpack.c.l.b16 %v279
    %v1163 = vunpack.c.l.b16 %v280
    %v1164 = vunpack.c.h.b16 %v280
    %v1165 = vunpack.c.l.b16 %v281
    %v1166 = vunpack.c.h.b16 %v281
    %v1167 = vunpack.c.l.b16 %v282
    %v1168 = vunpack.c.h.b16 %v282
    %v1169 = vunpack.c.l.b16 %v283
    %v1170 = vunpack.c.h.b16 %v283
    %v1171 = vunpack.c.l.b16 %v284
    %v1172 = vunpack.c.l.b16 %v285
    %v1173 = vunpack.c.h.b16 %v285
    %v1174 = vunpack.c.l.b16 %v286
    %v1175 = vunpack.c.h.b16 %v286
    %v1176 = vunpack.c.l.b16 %v287
    %v1177 = vunpack.c.h.b16 %v287
    %v1178 = vunpack.c.l.b16 %v288
    %v1179 = vunpack.c.h.b16 %v288
    %v1180 = vunpack.c.l.b16 %v289
    %v1181 = vunpack.c.l.b16 %v290
    %v1182 = vunpack.c.h.b16 %v290
    %v1183 = vunpack.c.l.b16 %v291
    %v1184 = vunpack.c.h.b16 %v291
    %v1185 = vunpack.c.l.b16 %v292
    %v1186 = vunpack.c.h.b16 %v292
    %v1187 = vunpack.c.l.b16 %v293
    %v1188 = vunpack.c.h.b16 %v293
    %v1189 = vunpack.c.l.b16 %v294
    %v1190 = vunpack.c.l.b16 %v295
    %v1191 = vunpack.c.h.b16 %v295
    %v1192 = vunpack.c.l.b16 %v296
    %v1193 = vunpack.c.h.b16 %v296
    %v1194 = vunpack.c.l.b16 %v297
    %v1195 = vunpack.c.h.b16 %v297
    %v1196 = vunpack.c.l.b16 %v298
    %v1197 = vunpack.c.h.b16 %v298
    %v1198 = vunpack.c.l.b16 %v299
    %v1199 = vunpack.c.l.b16 %v300
    %v1200 = vunpack.c.h.b16 %v300
    %v1201 = vunpack.c.l.b16 %v301
    %v1202 = vunpack.c.h.b16 %v301
    %v1203 = vunpack.c.l.b16 %v302
    %v1204 = vunpack.c.h.b16 %v302
    %v1205 = vunpack.c.l.b16 %v303
    %v1206 = vunpack.c.h.b16 %v303
    %v1207 = vunpack.c.l.b16 %v304
    %v1208 = vunpack.c.l.b16 %v305
    %v1209 = vunpack.c.h.b16 %v305
    %v1210 = vunpack.c.l.b16 %v306
    %v1211 = vunpack.c.h.b16 %v306
    %v1212 = vunpack.c.l.b16 %v307
    %v1213 = vunpack.c.h.b16 %v307
    %v1214 = vunpack.c.l.b16 %v308
    %v1215 = vunpack.c.h.b16 %v308
    %v1216 = vunpack.c.l.b16 %v309
    %v1217 = vunpack.c.l.b16 %v310
    %v1218 = vunpack.c.h.b16 %v310
    %v1219 = vunpack.c.l.b16 %v311
    %v1220 = vunpack.c.h.b16 %v311
    %v1221 = vunpack.c.l.b16 %v312
    %v1222 = vunpack.c.h.b16 %v312
    %v1223 = vunpack.c.l.b16 %v313
    %v1224 = vunpack.c.h.b16 %v313
    %v1225 = vunpack.c.l.b16 %v314
    %v1226 = vunpack.c.l.b16 %v315
    %v1227 = vunpack.c.h.b16 %v315
    %v1228 = vunpack.c.l.b16 %v316
    %v1229 = vunpack.c.h.b16 %v316
    %v1230 = vunpack.c.l.b16 %v317
    %v1231 = vunpack.c.h.b16 %v317
    %v1232 = vunpack.c.l.b16 %v318
    %v1233 = vunpack.c.h.b16 %v318
    %v1234 = vunpack.c.l.b16 %v319
    %v1235 = vunpack.c.l.b16 %v320
    %v1236 = vunpack.c.h.b16 %v320
    %v1237 = vunpack.c.l.b16 %v321
    %v1238 = vunpack.c.h.b16 %v321
    %v1239 = vunpack.c.l.b16 %v322
    %v1240 = vunpack.c.h.b16 %v322
    %v1241 = vunpack.c.l.b16 %v323
    %v1242 = vunpack.c.h.b16 %v323
    %v1243 = vunpack.c.l.b16 %v324
    %v1244 = vunpack.c.l.b16 %v325
    %v1245 = vunpack.c.h.b16 %v325
    %v1246 = vunpack.c.l.b16 %v326
    %v1247 = vunpack.c.h.b16 %v326
    %v1248 = vunpack.c.l.b16 %v327
    %v1249 = vunpack.c.h.b16 %v327
    %v1250 = vunpack.c.l.b16 %v328
    %v1251 = vunpack.c.h.b16 %v328
    %v1252 = vunpack.c.l.b16 %v329
    %v1253 = vunpack.c.l.b16 %v330
    %v1254 = vunpack.c.h.b16 %v330
    %v1255 = vunpack.c.l.b16 %v331
    %v1256 = vunpack.c.h.b16 %v331
    %v1257 = vunpack.c.l.b16 %v332
    %v1258 = vunpack.c.h.b16 %v332
    %v1259 = vunpack.c.l.b16 %v333
    %v1260 = vunpack.c.h.b16 %v333
    %v1261 = vunpack.c.l.b16 %v334
    %v1262 = vunpack.c.l.b16 %v335
    %v1263 = vunpack.c.h.b16 %v335
    %v1264 = vunpack.c.l.b16 %v336
    %v1265 = vunpack.c.h.b16 %v336
    %v1266 = vunpack.c.l.b16 %v337
    %v1267 = vunpack.c.h.b16 %v337
    %v1268 = vunpack.c.l.b16 %v338
    %v1269 = vunpack.c.h.b16 %v338
    %v1270 = vunpack.c.l.b16 %v339
    %v1271 = vunpack.c.l.b16 %v340
    %v1272 = vunpack.c.h.b16 %v340
    %v1273 = vunpack.c.l.b16 %v341
    %v1274 = vunpack.c.h.b16 %v341
    %v1275 = vunpack.c.l.b16 %v342
    %v1276 = vunpack.c.h.b16 %v342
    %v1277 = vunpack.c.l.b16 %v343
    %v1278 = vunpack.c.h.b16 %v343
    %v1279 = vunpack.c.l.b16 %v344
    %v1280 = vunpack.c.l.b16 %v345
    %v1281 = vunpack.c.h.b16 %v345
    %v1282 = vunpack.c.l.b16 %v346
    %v1283 = vunpack.c.h.b16 %v346
    %v1284 = vunpack.c.l.b16 %v347
    %v1285 = vunpack.c.h.b16 %v347
    %v1286 = vunpack.c.l.b16 %v348
    %v1287 = vunpack.c.h.b16 %v348
    %v1288 = vunpack.c.l.b16 %v349
    %v1289 = vunpack.c.l.b16 %v350
    %v1290 = vunpack.c.h.b16 %v350
    %v1291 = vunpack.c.l.b16 %v351
    %v1292 = vunpack.c.h.b16 %v351
    %v1293 = vunpack.c.l.b16 %v352
    %v1294 = vunpack.c.h.b16 %v352
    %v1295 = vunpack.c.l.b16 %v353
    %v1296 = vunpack.c.h.b16 %v353
    %v1297 = vunpack.c.l.b16 %v354
    %v1298 = vunpack.c.l.b16 %v355
    %v1299 = vunpack.c.h.b16 %v355
    %v1300 = vunpack.c.l.b16 %v356
    %v1301 = vunpack.c.h.b16 %v356
    %v1302 = vunpack.c.l.b16 %v357
    %v1303 = vunpack.c.h.b16 %v357
    %v1304 = vunpack.c.l.b16 %v358
    %v1305 = vunpack.c.h.b16 %v358
    %v1306 = vunpack.c.l.b16 %v359
    %v1307 = vunpack.c.l.b16 %v360
    %v1308 = vunpack.c.h.b16 %v360
    %v1309 = vunpack.c.l.b16 %v361
    %v1310 = vunpack.c.h.b16 %v361
    %v1311 = vunpack.c.l.b16 %v362
    %v1312 = vunpack.c.h.b16 %v362
    %v1313 = vunpack.c.l.b16 %v363
    %v1314 = vunpack.c.h.b16 %v363
    %v1315 = vunpack.c.l.b16 %v364
    %v1316 = vunpack.c.l.b16 %v365
    %v1317 = vunpack.c.h.b16 %v365
    %v1318 = vunpack.c.l.b16 %v366
    %v1319 = vunpack.c.h.b16 %v366
    %v1320 = vunpack.c.l.b16 %v367
    %v1321 = vunpack.c.h.b16 %v367
    %v1322 = vunpack.c.l.b16 %v368
    %v1323 = vunpack.c.h.b16 %v368
    %v1324 = vunpack.c.l.b16 %v369
    %v1325 = vunpack.c.l.b16 %v370
    %v1326 = vunpack.c.h.b16 %v370
    %v1327 = vunpack.c.l.b16 %v371
    %v1328 = vunpack.c.h.b16 %v371
    %v1329 = vunpack.c.l.b16 %v372
    %v1330 = vunpack.c.h.b16 %v372
    %v1331 = vunpack.c.l.b16 %v373
    %v1332 = vunpack.c.h.b16 %v373
    %v1333 = vunpack.c.l.b16 %v374
    %v1334 = vpack.c.b16 %v767, %v758
    %v1335 = vpack.c.b16 %v768, %v759
    %v1336 = vpack.c.b16 %v769, %v760
    %v1337 = vpack.c.b16 %v770, %v761
    %v1338 = vpack.c.b16 %v771, %v762
    %v1339 = vpack.c.b16 %v772, %v763
    %v1340 = vpack.c.b16 %v773, %v764
    %v1341 = vpack.c.b16 %v774, %v765
    %v1342 = vpack.c.b16 %v775, %v766
    %v1343 = vpack.c.b16 %v785, %v776
    %v1344 = vpack.c.b16 %v786, %v777
    %v1345 = vpack.c.b16 %v787, %v778
    %v1346 = vpack.c.b16 %v788, %v779
    %v1347 = vpack.c.b16 %v789, %v780
    %v1348 = vpack.c.b16 %v790, %v781
    %v1349 = vpack.c.b16 %v791, %v782
    %v1350 = vpack.c.b16 %v792, %v783
    %v1351 = vpack.c.b16 %v793, %v784
    %v1352 = vpack.c.b16 %v803, %v794
    %v1353 = vpack.c.b16 %v804, %v795
    %v1354 = vpack.c.b16 %v805, %v796
    %v1355 = vpack.c.b16 %v806, %v797
    %v1356 = vpack.c.b16 %v807, %v798
    %v1357 = vpack.c.b16 %v808, %v799
    %v1358 = vpack.c.b16 %v809, %v800
    %v1359 = vpack.c.b16 %v810, %v801
    %v1360 = vpack.c.b16 %v811, %v802
    %v1361 = vpack.c.b16 %v821, %v812
    %v1362 = vpack.c.b16 %v822, %v813
    %v1363 = vpack.c.b16 %v823, %v814
    %v1364 = vpack.c.b16 %v824, %v815
    %v1365 = vpack.c.b16 %v825, %v816
    %v1366 = vpack.c.b16 %v826, %v817
    %v1367 = vpack.c.b16 %v827, %v818
    %v1368 = vpack.c.b16 %v828, %v819
    %v1369 = vpack.c.b16 %v829, %v820
    %v1370 = vpack.c.b16 %v839, %v830
    %v1371 = vpack.c.b16 %v840, %v831
    %v1372 = vpack.c.b16 %v841, %v832
    %v1373 = vpack.c.b16 %v842, %v833
    %v1374 = vpack.c.b16 %v843, %v834
    %v1375 = vpack.c.b16 %v844, %v835
    %v1376 = vpack.c.b16 %v845, %v836
    %v1377 = vpack.c.b16 %v846, %v837
    %v1378 = vpack.c.b16 %v847, %v838
    %v1379 = vpack.c.b16 %v857, %v848
    %v1380 = vpack.c.b16 %v858, %v849
    %v1381 = vpack.c.b16 %v859, %v850
    %v1382 = vpack.c.b16 %v860, %v851
    %v1383 = vpack.c.b16 %v861, %v852
    %v1384 = vpack.c.b16 %v862, %v853
    %v1385 = vpack.c.b16 %v863, %v854
    %v1386 = vpack.c.b16 %v864, %v855
    %v1387 = vpack.c.b16 %v865, %v856
    %v1388 = vpack.c.b16 %v875, %v866
    %v1389 = vpack.c.b16 %v876, %v867
    %v1390 = vpack.c.b16 %v877, %v868
    %v1391 = vpack.c.b16 %v878, %v869
    %v1392 = vpack.c.b16 %v879, %v870
    %v1393 = vpack.c.b16 %v880, %v871
    %v1394 = vpack.c.b16 %v881, %v872
    %v1395 = vpack.c.b16 %v882, %v873
    %v1396 = vpack.c.b16 %v883, %v874
    %v1397 = vpack.c.b16 %v893, %v884
    %v1398 = vpack.c.b16 %v894, %v885
    %v1399 = vpack.c.b16 %v895, %v886
    %v1400 = vpack.c.b16 %v896, %v887
    %v1401 = vpack.c.b16 %v897, %v888
    %v1402 = vpack.c.b16 %v898, %v889
    %v1403 = vpack.c.b16 %v899, %v890
    %v1404 = vpack.c.b16 %v900, %v891
    %v1405 = vpack.c.b16 %v901, %v892
    %v1406 = vpack.c.b16 %v911, %v902
    %v1407 = vpack.c.b16 %v912, %v903
    %v1408 = vpack.c.b16 %v913, %v904
    %v1409 = vpack.c.b16 %v914, %v905
    %v1410 = vpack.c.b16 %v915, %v906
    %v1411 = vpack.c.b16 %v916, %v907
    %v1412 = vpack.c.b16 %v917, %v908
    %v1413 = vpack.c.b16 %v918, %v909
    %v1414 = vpack.c.b16 %v919, %v910
    %v1415 = vpack.c.b16 %v929, %v920
    %v1416 = vpack.c.b16 %v930, %v921
    %v1417 = vpack.c.b16 %v931, %v922
    %v1418 = vpack.c.b16 %v932, %v923
    %v1419 = vpack.c.b16 %v933, %v924
    %v1420 = vpack.c.b16 %v934, %v925
    %v1421 = vpack.c.b16 %v935, %v926
    %v1422 = vpack.c.b16 %v936, %v927
    %v1423 = vpack.c.b16 %v937, %v928
    %v1424 = vpack.c.b16 %v947, %v938
    %v1425 = vpack.c.b16 %v948, %v939
    %v1426 = vpack.c.b16 %v949, %v940
    %v1427 = vpack.c.b16 %v950, %v941
    %v1428 = vpack.c.b16 %v951, %v942
    %v1429 = vpack.c.b16 %v952, %v943
    %v1430 = vpack.c.b16 %v953, %v944
    %v1431 = vpack.c.b16 %v954, %v945
    %v1432 = vpack.c.b16 %v955, %v946
    %v1433 = vpack.c.b16 %v965, %v956
    %v1434 = vpack.c.b16 %v966, %v957
    %v1435 = vpack.c.b16 %v967, %v958
    %v1436 = vpack.c.b16 %v968, %v959
    %v1437 = vpack.c.b16 %v969, %v960
    %v1438 = vpack.c.b16 %v970, %v961
    %v1439 = vpack.c.b16 %v971, %v962
    %v1440 = vpack.c.b16 %v972, %v963
    %v1441 = vpack.c.b16 %v973, %v964
    %v1442 = vpack.c.b16 %v983, %v974
    %v1443 = vpack.c.b16 %v984, %v975
    %v1444 = vpack.c.b16 %v985, %v976
    %v1445 = vpack.c.b16 %v986, %v977
    %v1446 = vpack.c.b16 %v987, %v978
    %v1447 = vpack.c.b16 %v988, %v979
    %v1448 = vpack.c.b16 %v989, %v980
    %v1449 = vpack.c.b16 %v990, %v981
    %v1450 = vpack.c.b16 %v991, %v982
    %v1451 = vpack.c.b16 %v1001, %v992
    %v1452 = vpack.c.b16 %v1002, %v993
    %v1453 = vpack.c.b16 %v1003, %v994
    %v1454 = vpack.c.b16 %v1004, %v995
    %v1455 = vpack.c.b16 %v1005, %v996
    %v1456 = vpack.c.b16 %v1006, %v997
    %v1457 = vpack.c.b16 %v1007, %v998
    %v1458 = vpack.c.b16 %v1008, %v999
    %v1459 = vpack.c.b16 %v1009, %v1000
    %v1460 = vpack.c.b16 %v1019, %v1010
    %v1461 = vpack.c.b16 %v1020, %v1011
    %v1462 = vpack.c.b16 %v1021, %v1012
    %v1463 = vpack.c.b16 %v1022, %v1013
    %v1464 = vpack.c.b16 %v1023, %v1014
    %v1465 = vpack.c.b16 %v1024, %v1015
    %v1466 = vpack.c.b16 %v1025, %v1016
    %v1467 = vpack.c.b16 %v1026, %v1017
    %v1468 = vpack.c.b16 %v1027, %v1018
    %v1469 = vpack.c.b16 %v1037, %v1028
    %v1470 = vpack.c.b16 %v1038, %v1029
    %v1471 = vpack.c.b16 %v1039, %v1030
    %v1472 = vpack.c.b16 %v1040, %v1031
    %v1473 = vpack.c.b16 %v1041, %v1032
    %v1474 = vpack.c.b16 %v1042, %v1033
    %v1475 = vpack.c.b16 %v1043, %v1034
    %v1476 = vpack.c.b16 %v1044, %v1035
    %v1477 = vpack.c.b16 %v1045, %v1036
    %v1478 = vpack.c.b16 %v1055, %v1046
    %v1479 = vpack.c.b16 %v1056, %v1047
    %v1480 = vpack.c.b16 %v1057, %v1048
    %v1481 = vpack.c.b16 %v1058, %v1049
    %v1482 = vpack.c.b16 %v1059, %v1050
    %v1483 = vpack.c.b16 %v1060, %v1051
    %v1484 = vpack.c.b16 %v1061, %v1052
    %v1485 = vpack.c.b16 %v1062, %v1053
    %v1486 = vpack.c.b16 %v1063, %v1054
    %v1487 = vpack.c.b16 %v1073, %v1064
    %v1488 = vpack.c.b16 %v1074, %v1065
    %v1489 = vpack.c.b16 %v1075, %v1066
    %v1490 = vpack.c.b16 %v1076, %v1067
    %v1491 = vpack.c.b16 %v1077, %v1068
    %v1492 = vpack.c.b16 %v1078, %v1069
    %v1493 = vpack.c.b16 %v1079, %v1070
    %v1494 = vpack.c.b16 %v1080, %v1071
    %v1495 = vpack.c.b16 %v1081, %v1072
    %v1496 = vpack.c.b16 %v1091, %v1082
    %v1497 = vpack.c.b16 %v1092, %v1083
    %v1498 = vpack.c.b16 %v1093, %v1084
    %v1499 = vpack.c.b16 %v1094, %v1085
    %v1500 = vpack.c.b16 %v1095, %v1086
    %v1501 = vpack.c.b16 %v1096, %v1087
    %v1502 = vpack.c.b16 %v1097, %v1088
    %v1503 = vpack.c.b16 %v1098, %v1089
    %v1504 = vpack.c.b16 %v1099, %v1090
    %v1505 = vpack.c.b16 %v1109, %v1100
    %v1506 = vpack.c.b16 %v1110, %v1101
    %v1507 = vpack.c.b16 %v1111, %v1102
    %v1508 = vpack.c.b16 %v1112, %v1103
    %v1509 = vpack.c.b16 %v1113, %v1104
    %v1510 = vpack.c.b16 %v1114, %v1105
    %v1511 = vpack.c.b16 %v1115, %v1106
    %v1512 = vpack.c.b16 %v1116, %v1107
    %v1513 = vpack.c.b16 %v1117, %v1108
    %v1514 = vpack.c.b16 %v1127, %v1118
    %v1515 = vpack.c.b16 %v1128, %v1119
    %v1516 = vpack.c.b16 %v1129, %v1120
    %v1517 = vpack.c.b16 %v1130, %v1121
    %v1518 = vpack.c.b16 %v1131, %v1122
    %v1519 = vpack.c.b16 %v1132, %v1123
    %v1520 = vpack.c.b16 %v1133, %v1124
    %v1521 = vpack.c.b16 %v1134, %v1125
    %v1522 = vpack.c.b16 %v1135, %v1126
    %v1523 = vpack.c.b16 %v1145, %v1136
    %v1524 = vpack.c.b16 %v1146, %v1137
    %v1525 = vpack.c.b16 %v1147, %v1138
    %v1526 = vpack.c.b16 %v1148, %v1139
    %v1527 = vpack.c.b16 %v1149, %v1140
    %v1528 = vpack.c.b16 %v1150, %v1141
    %v1529 = vpack.c.b16 %v1151, %v1142
    %v1530 = vpack.c.b16 %v1152, %v1143
    %v1531 = vpack.c.b16 %v1153, %v1144
    %v1532 = vpack.c.b16 %v1163, %v1154
    %v1533 = vpack.c.b16 %v1164, %v1155
    %v1534 = vpack.c.b16 %v1165, %v1156
    %v1535 = vpack.c.b16 %v1166, %v1157
    %v1536 = vpack.c.b16 %v1167, %v1158
    %v1537 = vpack.c.b16 %v1168, %v1159
    %v1538 = vpack.c.b16 %v1169, %v1160
    %v1539 = vpack.c.b16 %v1170, %v1161
    %v1540 = vpack.c.b16 %v1171, %v1162
    %v1541 = vpack.c.b16 %v1181, %v1172
    %v1542 = vpack.c.b16 %v1182, %v1173
    %v1543 = vpack.c.b16 %v1183, %v1174
    %v1544 = vpack.c.b16 %v1184, %v1175
    %v1545 = vpack.c.b16 %v1185, %v1176
    %v1546 = vpack.c.b16 %v1186, %v1177
    %v1547 = vpack.c.b16 %v1187, %v1178
    %v1548 = vpack.c.b16 %v1188, %v1179
    %v1549 = vpack.c.b16 %v1189, %v1180
    %v1550 = vpack.c.b16 %v1199, %v1190
    %v1551 = vpack.c.b16 %v1200, %v1191
    %v1552 = vpack.c.b16 %v1201, %v1192
    %v1553 = vpack.c.b16 %v1202, %v1193
    %v1554 = vpack.c.b16 %v1203, %v1194
    %v1555 = vpack.c.b16 %v1204, %v1195
    %v1556 = vpack.c.b16 %v1205, %v1196
    %v1557 = vpack.c.b16 %v1206, %v1197
    %v1558 = vpack.c.b16 %v1207, %v1198
    %v1559 = vpack.c.b16 %v1217, %v1208
    %v1560 = vpack.c.b16 %v1218, %v1209
    %v1561 = vpack.c.b16 %v1219, %v1210
    %v1562 = vpack.c.b16 %v1220, %v1211
    %v1563 = vpack.c.b16 %v1221, %v1212
    %v1564 = vpack.c.b16 %v1222, %v1213
    %v1565 = vpack.c.b16 %v1223, %v1214
    %v1566 = vpack.c.b16 %v1224, %v1215
    %v1567 = vpack.c.b16 %v1225, %v1216
    %v1568 = vpack.c.b16 %v1235, %v1226
    %v1569 = vpack.c.b16 %v1236, %v1227
    %v1570 = vpack.c.b16 %v1237, %v1228
    %v1571 = vpack.c.b16 %v1238, %v1229
    %v1572 = vpack.c.b16 %v1239, %v1230
    %v1573 = vpack.c.b16 %v1240, %v1231
    %v1574 = vpack.c.b16 %v1241, %v1232
    %v1575 = vpack.c.b16 %v1242, %v1233
    %v1576 = vpack.c.b16 %v1243, %v1234
    %v1577 = vpack.c.b16 %v1253, %v1244
    %v1578 = vpack.c.b16 %v1254, %v1245
    %v1579 = vpack.c.b16 %v1255, %v1246
    %v1580 = vpack.c.b16 %v1256, %v1247
    %v1581 = vpack.c.b16 %v1257, %v1248
    %v1582 = vpack.c.b16 %v1258, %v1249
    %v1583 = vpack.c.b16 %v1259, %v1250
    %v1584 = vpack.c.b16 %v1260, %v1251
    %v1585 = vpack.c.b16 %v1261, %v1252
    %v1586 = vpack.c.b16 %v1271, %v1262
    %v1587 = vpack.c.b16 %v1272, %v1263
    %v1588 = vpack.c.b16 %v1273, %v1264
    %v1589 = vpack.c.b16 %v1274, %v1265
    %v1590 = vpack.c.b16 %v1275, %v1266
    %v1591 = vpack.c.b16 %v1276, %v1267
    %v1592 = vpack.c.b16 %v1277, %v1268
    %v1593 = vpack.c.b16 %v1278, %v1269
    %v1594 = vpack.c.b16 %v1279, %v1270
    %v1595 = vpack.c.b16 %v1289, %v1280
    %v1596 = vpack.c.b16 %v1290, %v1281
    %v1597 = vpack.c.b16 %v1291, %v1282
    %v1598 = vpack.c.b16 %v1292, %v1283
    %v1599 = vpack.c.b16 %v1293, %v1284
    %v1600 = vpack.c.b16 %v1294, %v1285
    %v1601 = vpack.c.b16 %v1295, %v1286
    %v1602 = vpack.c.b16 %v1296, %v1287
    %v1603 = vpack.c.b16 %v1297, %v1288
    %v1604 = vpack.c.b16 %v1307, %v1298
    %v1605 = vpack.c.b16 %v1308, %v1299
    %v1606 = vpack.c.b16 %v1309, %v1300
    %v1607 = vpack.c.b16 %v1310, %v1301
    %v1608 = vpack.c.b16 %v1311, %v1302
    %v1609 = vpack.c.b16 %v1312, %v1303
    %v1610 = vpack.c.b16 %v1313, %v1304
    %v1611 = vpack.c.b16 %v1314, %v1305
    %v1612 = vpack.c.b16 %v1315, %v1306
    %v1613 = vpack.c.b16 %v1325, %v1316
    %v1614 = vpack.c.b16 %v1326, %v1317
    %v1615 = vpack.c.b16 %v1327, %v1318
    %v1616 = vpack.c.b16 %v1328, %v1319
    %v1617 = vpack.c.b16 %v1329, %v1320
    %v1618 = vpack.c.b16 %v1330, %v1321
    %v1619 = vpack.c.b16 %v1331, %v1322
    %v1620 = vpack.c.b16 %v1332, %v1323
    %v1621 = vpack.c.b16 %v1333, %v1324
    %1910 = vmatprep.subr.bf16.mxu0 %v1398
    %1911 = vmatpush1.bf16.msra.mxu0 %v1397
    %1912 = vmatprep.subr.bf16.mxu0 %v1389
    %1913 = vmatpush1.bf16.msra.mxu0 %v1388
    %1914 = vmatprep.subr.bf16.mxu0 %v1380
    %1915 = vmatpush1.bf16.msra.mxu0 %v1379
    %1916 = vmatprep.subr.bf16.mxu0 %v1371
    %1917 = vmatpush1.bf16.msra.mxu0 %v1370
    %1918 = vmatprep.subr.bf16.mxu0 %v1362
    %1919 = vmatpush1.bf16.msra.mxu0 %v1361
    %1920 = vmatprep.subr.bf16.mxu0 %v1353
    %1921 = vmatpush1.bf16.msra.mxu0 %v1352
    %1922 = vmatprep.subr.bf16.mxu0 %v1344
    %1923 = vmatpush1.bf16.msra.mxu0 %v1343
    %1924 = vmatprep.subr.bf16.mxu0 %v1335
    %1925 = vmatpush1.bf16.msra.mxu0 %v1334
    %1926 = vmatprep.subr.bf16.mxu0 %v1470
    %1927 = vmatpush2.bf16.msra.mxu0 %v1469
    %1928 = vmatprep.subr.bf16.mxu0 %v1461
    %1929 = vmatpush2.bf16.msra.mxu0 %v1460
    %1930 = vmatprep.subr.bf16.mxu0 %v1452
    %1931 = vmatpush2.bf16.msra.mxu0 %v1451
    %1932 = vmatprep.subr.bf16.mxu0 %v1443
    %1933 = vmatpush2.bf16.msra.mxu0 %v1442
    %1934 = vmatprep.subr.bf16.mxu0 %v1434
    %1935 = vmatpush2.bf16.msra.mxu0 %v1433
    %1936 = vmatprep.subr.bf16.mxu0 %v1425
    %1937 = vmatpush2.bf16.msra.mxu0 %v1424
    %1938 = vmatprep.subr.bf16.mxu0 %v1416
    %1939 = vmatpush2.bf16.msra.mxu0 %v1415
    %1940 = vmatprep.subr.bf16.mxu0 %v1407
    %1941 = vmatpush2.bf16.msra.mxu0 %v1406
    %1942 = vmatprep.mubr.bf16.mxu0 %v431
    %1943 = vmatmul.mubr.bf16.gmra.mxu0 %v430
    %v1944 = vpop.f32.mrf.mxu0
    %v1945 = vadd.f32 %v382, %v1944
    %v1946 = vpop.f32.mrf.mxu0
    %v1947 = vadd.f32 %v386, %v1946
    %v1948 = vpop.f32.mrf.mxu0
    %v1949 = vpop.f32.mrf.mxu0
    %1950 = vdwg.mxu0
    %1951 = vmatprep.subr.bf16.mxu0 %v1542
    %1952 = vmatpush1.bf16.msra.mxu0 %v1541
    %1953 = vmatprep.subr.bf16.mxu0 %v1533
    %1954 = vmatpush1.bf16.msra.mxu0 %v1532
    %1955 = vmatprep.subr.bf16.mxu0 %v1524
    %1956 = vmatpush1.bf16.msra.mxu0 %v1523
    %1957 = vmatprep.subr.bf16.mxu0 %v1515
    %1958 = vmatpush1.bf16.msra.mxu0 %v1514
    %1959 = vmatprep.subr.bf16.mxu0 %v1506
    %1960 = vmatpush1.bf16.msra.mxu0 %v1505
    %1961 = vmatprep.subr.bf16.mxu0 %v1497
    %1962 = vmatpush1.bf16.msra.mxu0 %v1496
    %1963 = vmatprep.subr.bf16.mxu0 %v1488
    %1964 = vmatpush1.bf16.msra.mxu0 %v1487
    %1965 = vmatprep.subr.bf16.mxu0 %v1479
    %1966 = vmatpush1.bf16.msra.mxu0 %v1478
    %1967 = vmatprep.subr.bf16.mxu0 %v1614
    %1968 = vmatpush2.bf16.msra.mxu0 %v1613
    %1969 = vmatprep.subr.bf16.mxu0 %v1605
    %1970 = vmatpush2.bf16.msra.mxu0 %v1604
    %1971 = vmatprep.subr.bf16.mxu0 %v1596
    %1972 = vmatpush2.bf16.msra.mxu0 %v1595
    %1973 = vmatprep.subr.bf16.mxu0 %v1587
    %1974 = vmatpush2.bf16.msra.mxu0 %v1586
    %1975 = vmatprep.subr.bf16.mxu0 %v1578
    %1976 = vmatpush2.bf16.msra.mxu0 %v1577
    %1977 = vmatprep.subr.bf16.mxu0 %v1569
    %1978 = vmatpush2.bf16.msra.mxu0 %v1568
    %1979 = vmatprep.subr.bf16.mxu0 %v1560
    %1980 = vmatpush2.bf16.msra.mxu0 %v1559
    %1981 = vmatprep.subr.bf16.mxu0 %v1551
    %1982 = vmatpush2.bf16.msra.mxu0 %v1550
    %1983 = vmatprep.mubr.bf16.mxu0 %v433
    %1984 = vmatmul.mubr.bf16.gmra.mxu0 %v432
    %v1985 = vpop.f32.mrf.mxu0
    %v1986 = vadd.f32 %v1945, %v1985
    %v1987 = vpop.f32.mrf.mxu0
    %v1988 = vadd.f32 %v1947, %v1987
    %v1989 = vpop.f32.mrf.mxu0
    %v1990 = vpop.f32.mrf.mxu0
    %1991 = vdwg.mxu0
    %1992 = vmatprep.subr.bf16.mxu0 %v1400
    %1993 = vmatpush1.bf16.msra.mxu0 %v1399
    %1994 = vmatprep.subr.bf16.mxu0 %v1391
    %1995 = vmatpush1.bf16.msra.mxu0 %v1390
    %1996 = vmatprep.subr.bf16.mxu0 %v1382
    %1997 = vmatpush1.bf16.msra.mxu0 %v1381
    %1998 = vmatprep.subr.bf16.mxu0 %v1373
    %1999 = vmatpush1.bf16.msra.mxu0 %v1372
    %2000 = vmatprep.subr.bf16.mxu0 %v1364
    %2001 = vmatpush1.bf16.msra.mxu0 %v1363
    %2002 = vmatprep.subr.bf16.mxu0 %v1355
    %2003 = vmatpush1.bf16.msra.mxu0 %v1354
    %2004 = vmatprep.subr.bf16.mxu0 %v1346
    %2005 = vmatpush1.bf16.msra.mxu0 %v1345
    %2006 = vmatprep.subr.bf16.mxu0 %v1337
    %2007 = vmatpush1.bf16.msra.mxu0 %v1336
    %2008 = vmatprep.subr.bf16.mxu0 %v1472
    %2009 = vmatpush2.bf16.msra.mxu0 %v1471
    %2010 = vmatprep.subr.bf16.mxu0 %v1463
    %2011 = vmatpush2.bf16.msra.mxu0 %v1462
    %2012 = vmatprep.subr.bf16.mxu0 %v1454
    %2013 = vmatpush2.bf16.msra.mxu0 %v1453
    %2014 = vmatprep.subr.bf16.mxu0 %v1445
    %2015 = vmatpush2.bf16.msra.mxu0 %v1444
    %2016 = vmatprep.subr.bf16.mxu0 %v1436
    %2017 = vmatpush2.bf16.msra.mxu0 %v1435
    %2018 = vmatprep.subr.bf16.mxu0 %v1427
    %2019 = vmatpush2.bf16.msra.mxu0 %v1426
    %2020 = vmatprep.subr.bf16.mxu0 %v1418
    %2021 = vmatpush2.bf16.msra.mxu0 %v1417
    %2022 = vmatprep.subr.bf16.mxu0 %v1409
    %2023 = vmatpush2.bf16.msra.mxu0 %v1408
    %2024 = vmatprep.mubr.bf16.mxu0 %v431
    %2025 = vmatmul.mubr.bf16.gmra.mxu0 %v430
    %v2026 = vpop.f32.mrf.mxu0
    %v2027 = vadd.f32 %v390, %v2026
    %v2028 = vpop.f32.mrf.mxu0
    %v2029 = vadd.f32 %v394, %v2028
    %v2030 = vpop.f32.mrf.mxu0
    %v2031 = vpop.f32.mrf.mxu0
    %2032 = vdwg.mxu0
    %2033 = vmatprep.subr.bf16.mxu0 %v1544
    %2034 = vmatpush1.bf16.msra.mxu0 %v1543
    %2035 = vmatprep.subr.bf16.mxu0 %v1535
    %2036 = vmatpush1.bf16.msra.mxu0 %v1534
    %2037 = vmatprep.subr.bf16.mxu0 %v1526
    %2038 = vmatpush1.bf16.msra.mxu0 %v1525
    %2039 = vmatprep.subr.bf16.mxu0 %v1517
    %2040 = vmatpush1.bf16.msra.mxu0 %v1516
    %2041 = vmatprep.subr.bf16.mxu0 %v1508
    %2042 = vmatpush1.bf16.msra.mxu0 %v1507
    %2043 = vmatprep.subr.bf16.mxu0 %v1499
    %2044 = vmatpush1.bf16.msra.mxu0 %v1498
    %2045 = vmatprep.subr.bf16.mxu0 %v1490
    %2046 = vmatpush1.bf16.msra.mxu0 %v1489
    %2047 = vmatprep.subr.bf16.mxu0 %v1481
    %2048 = vmatpush1.bf16.msra.mxu0 %v1480
    %2049 = vmatprep.subr.bf16.mxu0 %v1616
    %2050 = vmatpush2.bf16.msra.mxu0 %v1615
    %2051 = vmatprep.subr.bf16.mxu0 %v1607
    %2052 = vmatpush2.bf16.msra.mxu0 %v1606
    %2053 = vmatprep.subr.bf16.mxu0 %v1598
    %2054 = vmatpush2.bf16.msra.mxu0 %v1597
    %2055 = vmatprep.subr.bf16.mxu0 %v1589
    %2056 = vmatpush2.bf16.msra.mxu0 %v1588
    %2057 = vmatprep.subr.bf16.mxu0 %v1580
    %2058 = vmatpush2.bf16.msra.mxu0 %v1579
    %2059 = vmatprep.subr.bf16.mxu0 %v1571
    %2060 = vmatpush2.bf16.msra.mxu0 %v1570
    %2061 = vmatprep.subr.bf16.mxu0 %v1562
    %2062 = vmatpush2.bf16.msra.mxu0 %v1561
    %2063 = vmatprep.subr.bf16.mxu0 %v1553
    %2064 = vmatpush2.bf16.msra.mxu0 %v1552
    %2065 = vmatprep.mubr.bf16.mxu0 %v433
    %2066 = vmatmul.mubr.bf16.gmra.mxu0 %v432
    %v2067 = vpop.f32.mrf.mxu0
    %v2068 = vadd.f32 %v2027, %v2067
    %v2069 = vpop.f32.mrf.mxu0
    %v2070 = vadd.f32 %v2029, %v2069
    %v2071 = vpop.f32.mrf.mxu0
    %v2072 = vpop.f32.mrf.mxu0
    %2073 = vdwg.mxu0
    %2074 = vmatprep.subr.bf16.mxu0 %v1402
    %2075 = vmatpush1.bf16.msra.mxu0 %v1401
    %2076 = vmatprep.subr.bf16.mxu0 %v1393
    %2077 = vmatpush1.bf16.msra.mxu0 %v1392
    %2078 = vmatprep.subr.bf16.mxu0 %v1384
    %2079 = vmatpush1.bf16.msra.mxu0 %v1383
    %2080 = vmatprep.subr.bf16.mxu0 %v1375
    %2081 = vmatpush1.bf16.msra.mxu0 %v1374
    %2082 = vmatprep.subr.bf16.mxu0 %v1366
    %2083 = vmatpush1.bf16.msra.mxu0 %v1365
    %2084 = vmatprep.subr.bf16.mxu0 %v1357
    %2085 = vmatpush1.bf16.msra.mxu0 %v1356
    %2086 = vmatprep.subr.bf16.mxu0 %v1348
    %2087 = vmatpush1.bf16.msra.mxu0 %v1347
    %2088 = vmatprep.subr.bf16.mxu0 %v1339
    %2089 = vmatpush1.bf16.msra.mxu0 %v1338
    %2090 = vmatprep.subr.bf16.mxu0 %v1474
    %2091 = vmatpush2.bf16.msra.mxu0 %v1473
    %2092 = vmatprep.subr.bf16.mxu0 %v1465
    %2093 = vmatpush2.bf16.msra.mxu0 %v1464
    %2094 = vmatprep.subr.bf16.mxu0 %v1456
    %2095 = vmatpush2.bf16.msra.mxu0 %v1455
    %2096 = vmatprep.subr.bf16.mxu0 %v1447
    %2097 = vmatpush2.bf16.msra.mxu0 %v1446
    %2098 = vmatprep.subr.bf16.mxu0 %v1438
    %2099 = vmatpush2.bf16.msra.mxu0 %v1437
    %2100 = vmatprep.subr.bf16.mxu0 %v1429
    %2101 = vmatpush2.bf16.msra.mxu0 %v1428
    %2102 = vmatprep.subr.bf16.mxu0 %v1420
    %2103 = vmatpush2.bf16.msra.mxu0 %v1419
    %2104 = vmatprep.subr.bf16.mxu0 %v1411
    %2105 = vmatpush2.bf16.msra.mxu0 %v1410
    %2106 = vmatprep.mubr.bf16.mxu0 %v431
    %2107 = vmatmul.mubr.bf16.gmra.mxu0 %v430
    %v2108 = vpop.f32.mrf.mxu0
    %v2109 = vadd.f32 %v398, %v2108
    %v2110 = vpop.f32.mrf.mxu0
    %v2111 = vadd.f32 %v402, %v2110
    %v2112 = vpop.f32.mrf.mxu0
    %v2113 = vpop.f32.mrf.mxu0
    %2114 = vdwg.mxu0
    %2115 = vmatprep.subr.bf16.mxu0 %v1546
    %2116 = vmatpush1.bf16.msra.mxu0 %v1545
    %2117 = vmatprep.subr.bf16.mxu0 %v1537
    %2118 = vmatpush1.bf16.msra.mxu0 %v1536
    %2119 = vmatprep.subr.bf16.mxu0 %v1528
    %2120 = vmatpush1.bf16.msra.mxu0 %v1527
    %2121 = vmatprep.subr.bf16.mxu0 %v1519
    %2122 = vmatpush1.bf16.msra.mxu0 %v1518
    %2123 = vmatprep.subr.bf16.mxu0 %v1510
    %2124 = vmatpush1.bf16.msra.mxu0 %v1509
    %2125 = vmatprep.subr.bf16.mxu0 %v1501
    %2126 = vmatpush1.bf16.msra.mxu0 %v1500
    %2127 = vmatprep.subr.bf16.mxu0 %v1492
    %2128 = vmatpush1.bf16.msra.mxu0 %v1491
    %2129 = vmatprep.subr.bf16.mxu0 %v1483
    %2130 = vmatpush1.bf16.msra.mxu0 %v1482
    %2131 = vmatprep.subr.bf16.mxu0 %v1618
    %2132 = vmatpush2.bf16.msra.mxu0 %v1617
    %2133 = vmatprep.subr.bf16.mxu0 %v1609
    %2134 = vmatpush2.bf16.msra.mxu0 %v1608
    %2135 = vmatprep.subr.bf16.mxu0 %v1600
    %2136 = vmatpush2.bf16.msra.mxu0 %v1599
    %2137 = vmatprep.subr.bf16.mxu0 %v1591
    %2138 = vmatpush2.bf16.msra.mxu0 %v1590
    %2139 = vmatprep.subr.bf16.mxu0 %v1582
    %2140 = vmatpush2.bf16.msra.mxu0 %v1581
    %2141 = vmatprep.subr.bf16.mxu0 %v1573
    %2142 = vmatpush2.bf16.msra.mxu0 %v1572
    %2143 = vmatprep.subr.bf16.mxu0 %v1564
    %2144 = vmatpush2.bf16.msra.mxu0 %v1563
    %2145 = vmatprep.subr.bf16.mxu0 %v1555
    %2146 = vmatpush2.bf16.msra.mxu0 %v1554
    %2147 = vmatprep.mubr.bf16.mxu0 %v433
    %2148 = vmatmul.mubr.bf16.gmra.mxu0 %v432
    %v2149 = vpop.f32.mrf.mxu0
    %v2150 = vadd.f32 %v2109, %v2149
    %v2151 = vpop.f32.mrf.mxu0
    %v2152 = vadd.f32 %v2111, %v2151
    %v2153 = vpop.f32.mrf.mxu0
    %v2154 = vpop.f32.mrf.mxu0
    %2155 = vdwg.mxu0
    %2156 = vmatprep.subr.bf16.mxu0 %v1404
    %2157 = vmatpush1.bf16.msra.mxu0 %v1403
    %2158 = vmatprep.subr.bf16.mxu0 %v1395
    %2159 = vmatpush1.bf16.msra.mxu0 %v1394
    %2160 = vmatprep.subr.bf16.mxu0 %v1386
    %2161 = vmatpush1.bf16.msra.mxu0 %v1385
    %2162 = vmatprep.subr.bf16.mxu0 %v1377
    %2163 = vmatpush1.bf16.msra.mxu0 %v1376
    %2164 = vmatprep.subr.bf16.mxu0 %v1368
    %2165 = vmatpush1.bf16.msra.mxu0 %v1367
    %2166 = vmatprep.subr.bf16.mxu0 %v1359
    %2167 = vmatpush1.bf16.msra.mxu0 %v1358
    %2168 = vmatprep.subr.bf16.mxu0 %v1350
    %2169 = vmatpush1.bf16.msra.mxu0 %v1349
    %2170 = vmatprep.subr.bf16.mxu0 %v1341
    %2171 = vmatpush1.bf16.msra.mxu0 %v1340
    %2172 = vmatprep.subr.bf16.mxu0 %v1476
    %2173 = vmatpush2.bf16.msra.mxu0 %v1475
    %2174 = vmatprep.subr.bf16.mxu0 %v1467
    %2175 = vmatpush2.bf16.msra.mxu0 %v1466
    %2176 = vmatprep.subr.bf16.mxu0 %v1458
    %2177 = vmatpush2.bf16.msra.mxu0 %v1457
    %2178 = vmatprep.subr.bf16.mxu0 %v1449
    %2179 = vmatpush2.bf16.msra.mxu0 %v1448
    %2180 = vmatprep.subr.bf16.mxu0 %v1440
    %2181 = vmatpush2.bf16.msra.mxu0 %v1439
    %2182 = vmatprep.subr.bf16.mxu0 %v1431
    %2183 = vmatpush2.bf16.msra.mxu0 %v1430
    %2184 = vmatprep.subr.bf16.mxu0 %v1422
    %2185 = vmatpush2.bf16.msra.mxu0 %v1421
    %2186 = vmatprep.subr.bf16.mxu0 %v1413
    %2187 = vmatpush2.bf16.msra.mxu0 %v1412
    %2188 = vmatprep.mubr.bf16.mxu0 %v431
    %2189 = vmatmul.mubr.bf16.gmra.mxu0 %v430
    %v2190 = vpop.f32.mrf.mxu0
    %v2191 = vadd.f32 %v406, %v2190
    %v2192 = vpop.f32.mrf.mxu0
    %v2193 = vadd.f32 %v410, %v2192
    %v2194 = vpop.f32.mrf.mxu0
    %v2195 = vpop.f32.mrf.mxu0
    %2196 = vdwg.mxu0
    %2197 = vmatprep.subr.bf16.mxu0 %v1548
    %2198 = vmatpush1.bf16.msra.mxu0 %v1547
    %2199 = vmatprep.subr.bf16.mxu0 %v1539
    %2200 = vmatpush1.bf16.msra.mxu0 %v1538
    %2201 = vmatprep.subr.bf16.mxu0 %v1530
    %2202 = vmatpush1.bf16.msra.mxu0 %v1529
    %2203 = vmatprep.subr.bf16.mxu0 %v1521
    %2204 = vmatpush1.bf16.msra.mxu0 %v1520
    %2205 = vmatprep.subr.bf16.mxu0 %v1512
    %2206 = vmatpush1.bf16.msra.mxu0 %v1511
    %2207 = vmatprep.subr.bf16.mxu0 %v1503
    %2208 = vmatpush1.bf16.msra.mxu0 %v1502
    %2209 = vmatprep.subr.bf16.mxu0 %v1494
    %2210 = vmatpush1.bf16.msra.mxu0 %v1493
    %2211 = vmatprep.subr.bf16.mxu0 %v1485
    %2212 = vmatpush1.bf16.msra.mxu0 %v1484
    %2213 = vmatprep.subr.bf16.mxu0 %v1620
    %2214 = vmatpush2.bf16.msra.mxu0 %v1619
    %2215 = vmatprep.subr.bf16.mxu0 %v1611
    %2216 = vmatpush2.bf16.msra.mxu0 %v1610
    %2217 = vmatprep.subr.bf16.mxu0 %v1602
    %2218 = vmatpush2.bf16.msra.mxu0 %v1601
    %2219 = vmatprep.subr.bf16.mxu0 %v1593
    %2220 = vmatpush2.bf16.msra.mxu0 %v1592
    %2221 = vmatprep.subr.bf16.mxu0 %v1584
    %2222 = vmatpush2.bf16.msra.mxu0 %v1583
    %2223 = vmatprep.subr.bf16.mxu0 %v1575
    %2224 = vmatpush2.bf16.msra.mxu0 %v1574
    %2225 = vmatprep.subr.bf16.mxu0 %v1566
    %2226 = vmatpush2.bf16.msra.mxu0 %v1565
    %2227 = vmatprep.subr.bf16.mxu0 %v1557
    %2228 = vmatpush2.bf16.msra.mxu0 %v1556
    %2229 = vmatprep.mubr.bf16.mxu0 %v433
    %2230 = vmatmul.mubr.bf16.gmra.mxu0 %v432
    %v2231 = vpop.f32.mrf.mxu0
    %v2232 = vadd.f32 %v2191, %v2231
    %v2233 = vpop.f32.mrf.mxu0
    %v2234 = vadd.f32 %v2193, %v2233
    %v2235 = vpop.f32.mrf.mxu0
    %v2236 = vpop.f32.mrf.mxu0
    %2237 = vdwg.mxu0
    %2238 = vmatprep.subr.bf16.mxu0 0
    %2239 = vmatpush1.bf16.msra.mxu0 %v1405
    %2240 = vmatprep.subr.bf16.mxu0 0
    %2241 = vmatpush1.bf16.msra.mxu0 %v1396
    %2242 = vmatprep.subr.bf16.mxu0 0
    %2243 = vmatpush1.bf16.msra.mxu0 %v1387
    %2244 = vmatprep.subr.bf16.mxu0 0
    %2245 = vmatpush1.bf16.msra.mxu0 %v1378
    %2246 = vmatprep.subr.bf16.mxu0 0
    %2247 = vmatpush1.bf16.msra.mxu0 %v1369
    %2248 = vmatprep.subr.bf16.mxu0 0
    %2249 = vmatpush1.bf16.msra.mxu0 %v1360
    %2250 = vmatprep.subr.bf16.mxu0 0
    %2251 = vmatpush1.bf16.msra.mxu0 %v1351
    %2252 = vmatprep.subr.bf16.mxu0 0
    %2253 = vmatpush1.bf16.msra.mxu0 %v1342
    %2254 = vmatprep.subr.bf16.mxu0 0
    %2255 = vmatpush2.bf16.msra.mxu0 %v1477
    %2256 = vmatprep.subr.bf16.mxu0 0
    %2257 = vmatpush2.bf16.msra.mxu0 %v1468
    %2258 = vmatprep.subr.bf16.mxu0 0
    %2259 = vmatpush2.bf16.msra.mxu0 %v1459
    %2260 = vmatprep.subr.bf16.mxu0 0
    %2261 = vmatpush2.bf16.msra.mxu0 %v1450
    %2262 = vmatprep.subr.bf16.mxu0 0
    %2263 = vmatpush2.bf16.msra.mxu0 %v1441
    %2264 = vmatprep.subr.bf16.mxu0 0
    %2265 = vmatpush2.bf16.msra.mxu0 %v1432
    %2266 = vmatprep.subr.bf16.mxu0 0
    %2267 = vmatpush2.bf16.msra.mxu0 %v1423
    %2268 = vmatprep.subr.bf16.mxu0 0
    %2269 = vmatpush2.bf16.msra.mxu0 %v1414
    %2270 = vmatprep.mubr.bf16.mxu0 %v431
    %2271 = vmatmul.mubr.bf16.gmra.mxu0 %v430
    %v2272 = vpop.f32.mrf.mxu0
    %v2273 = vadd.f32 %v414, %v2272
    %v2274 = vpop.f32.mrf.mxu0
    %v2275 = vpop.f32.mrf.mxu0
    %v2276 = vpop.f32.mrf.mxu0
    %2277 = vdwg.mxu0
    %2278 = vmatprep.subr.bf16.mxu0 0
    %2279 = vmatpush1.bf16.msra.mxu0 %v1549
    %2280 = vmatprep.subr.bf16.mxu0 0
    %2281 = vmatpush1.bf16.msra.mxu0 %v1540
    %2282 = vmatprep.subr.bf16.mxu0 0
    %2283 = vmatpush1.bf16.msra.mxu0 %v1531
    %2284 = vmatprep.subr.bf16.mxu0 0
    %2285 = vmatpush1.bf16.msra.mxu0 %v1522
    %2286 = vmatprep.subr.bf16.mxu0 0
    %2287 = vmatpush1.bf16.msra.mxu0 %v1513
    %2288 = vmatprep.subr.bf16.mxu0 0
    %2289 = vmatpush1.bf16.msra.mxu0 %v1504
    %2290 = vmatprep.subr.bf16.mxu0 0
    %2291 = vmatpush1.bf16.msra.mxu0 %v1495
    %2292 = vmatprep.subr.bf16.mxu0 0
    %2293 = vmatpush1.bf16.msra.mxu0 %v1486
    %2294 = vmatprep.subr.bf16.mxu0 0
    %2295 = vmatpush2.bf16.msra.mxu0 %v1621
    %2296 = vmatprep.subr.bf16.mxu0 0
    %2297 = vmatpush2.bf16.msra.mxu0 %v1612
    %2298 = vmatprep.subr.bf16.mxu0 0
    %2299 = vmatpush2.bf16.msra.mxu0 %v1603
    %2300 = vmatprep.subr.bf16.mxu0 0
    %2301 = vmatpush2.bf16.msra.mxu0 %v1594
    %2302 = vmatprep.subr.bf16.mxu0 0
    %2303 = vmatpush2.bf16.msra.mxu0 %v1585
    %2304 = vmatprep.subr.bf16.mxu0 0
    %2305 = vmatpush2.bf16.msra.mxu0 %v1576
    %2306 = vmatprep.subr.bf16.mxu0 0
    %2307 = vmatpush2.bf16.msra.mxu0 %v1567
    %2308 = vmatprep.subr.bf16.mxu0 0
    %2309 = vmatpush2.bf16.msra.mxu0 %v1558
    %2310 = vmatprep.mubr.bf16.mxu0 %v433
    %2311 = vmatmul.mubr.bf16.gmra.mxu0 %v432
    %v2312 = vpop.f32.mrf.mxu0
    %v2313 = vadd.f32 %v2273, %v2312
    %v2314 = vpop.f32.mrf.mxu0
    %v2315 = vpop.f32.mrf.mxu0
    %v2316 = vpop.f32.mrf.mxu0
    %2317 = vdwg.mxu0
    %v2318 = vmax.f32 %v1986, 0.0
    %v2319 = vmax.f32 %v1988, 0.0
    %v2320 = vmax.f32 %v2068, 0.0
    %v2321 = vmax.f32 %v2070, 0.0
    %v2322 = vmax.f32 %v2150, 0.0
    %v2323 = vmax.f32 %v2152, 0.0
    %v2324 = vmax.f32 %v2232, 0.0
    %v2325 = vmax.f32 %v2234, 0.0
    %v2326 = vrot.slane %v2313, 1
    %v2327 = vrot.slane %v2313, 7
    %v2328 = vlaneseq
    %v2329 = vshrl.u32 %v2328, 7
    %v2330 = vand.u32 %v2329, 1
    %vm2331 = vcmp.eq.s32.totalorder %v2330, 0
    %v2332 = vsel %vm2331, %v2326, %v2327
    %v2333 = vadd.f32 %v2313, %v2332
    %v2334 = vmul.f32 %v2333, 0.5
    %2336 = vset.pattern.permute.xlu0 0
    %2337 = vperm.xlu0 %2336, %v2334
    %v2338 = vpop.permute.xlu0 %2337
    %v2340 = vmul.f32 %v2338, %v2318
    %v2341 = vmul.f32 %v2338, %v2319
    %v2342 = vmul.f32 %v2338, %v2320
    %v2343 = vmul.f32 %v2338, %v2321
    %2344 = vset.pattern.permute.xlu0 1
    %2345 = vperm.xlu0 %2344, %v2334
    %v2346 = vpop.permute.xlu0 %2345
    %v2348 = vmul.f32 %v2346, %v2322
    %v2349 = vmul.f32 %v2346, %v2323
    %v2350 = vmul.f32 %v2346, %v2324
    %v2351 = vmul.f32 %v2346, %v2325
    %v2352 = vadd.f32 %v2340, %v2348
    %v2353 = vadd.f32 %v2341, %v2349
    %v2354 = vadd.f32 %v2342, %v2350
    %v2355 = vadd.f32 %v2343, %v2351
    %2356 = vst [vmem:[#allocation8] sm:$0xff] %v2352
    %2357 = vst [vmem:[#allocation8 + $0x8] sm:$0xff] %v2353
    %2358 = vst [vmem:[#allocation8 + $0x10] sm:$0xff] %v2354
    %2359 = vst [vmem:[#allocation8 + $0x18] sm:$0xff] %v2355
    // Predicated region
    $region26: #{tpu_custom_call.1} parent=1 // pred_check
      _
    $region27: #{tpu_custom_call.1} parent=1 // pred_check_branch
      %2361 = sbr.rel (0) target = $region29
    $region28: #{tpu_custom_call.1} parent=1 // pred_region
      %s2363 = ssub.s32 512, 512
      %2364 = vsyncadd [#allocation4], %s2363
      %s2366 = sshll.u32 [#allocation8], 4
      %s2367 = int_to_ptr.vmem [resolvable:$true] %s2366
      %2369 = dma.vmem_to_hbm [thread:$0]  %s2367, 512, %s3, [#allocation4]
    $region29: #{tpu_custom_call.1} parent=1 // pred_fallthru
      _
    // Predicated region
    $region30: #{tpu_custom_call.1} parent=1 // pred_check
      _
    $region31: #{tpu_custom_call.1} parent=1 // pred_check_branch
      %2371 = sbr.rel (0) target = $region33
    $region32: #{tpu_custom_call.1} parent=1 // pred_region
      %2372 = dma.done [#allocation4], 512
    $region33: #{tpu_custom_call.1} parent=1 // pred_fallthru
      _
    %2373 = vsyncpa [#allocation3], 1
    %2374 = vsyncpa [#allocation6], 1
    %2375 = vsyncpa [#allocation4], 1

</llo_original>
